<compile_context>
chip_gen: v7x
topology: tpu7x:2x2x1
jax: 0.10.0
libtpu: 0.0.40
codegen_flags: <defaults>
</compile_context>

<pallas_src>
import jax
import jax.numpy as jnp
from jax.experimental import pallas as pl
from jax.experimental.pallas import tpu as pltpu

BN_EPS = 1e-5
NORM_EPS = 1e-12  # guards padded zero rows; negligible vs. real feature norms


def _round_up(x, m):
    return (x + m - 1) // m * m


def _custom_clip_kernel(
    x_ref,      # (tb, tk)  bf16  flattened image tile
    wenc_ref,   # (tk, D)   bf16  encoder projection tile (K-streamed)
    w1_ref,     # (D, D)    bf16  conv1 weight with BN folded in
    w2_ref,     # (D, D)    bf16  conv2 weight
    bias_ref,   # (2, D)    f32   row 0: b1 (BN + vctx folded), row 1: b2
    out_ref,    # (tb, D)   f32   normalized image features
    acc_ref,    # (tb, D)   f32   encoder accumulator (VMEM scratch)
):
    k = pl.program_id(1)

    @pl.when(k == 0)
    def _():
        acc_ref[...] = jnp.zeros_like(acc_ref)

    # ---- image encoder (stub): K-tiled linear projection of the flattened image ----
    acc_ref[...] += jnp.dot(
        x_ref[...], wenc_ref[...], preferred_element_type=jnp.float32
    )

    @pl.when(k == pl.num_programs(1) - 1)
    def _():
        feats = acc_ref[...]
        b1 = bias_ref[0:1, :]
        b2 = bias_ref[1:2, :]

        # ---- VPT_image_trans: (Conv1x1 + BN folded) -> ReLU -> Conv1x1 ----
        h = jnp.dot(
            feats.astype(w1_ref.dtype), w1_ref[...],
            preferred_element_type=jnp.float32,
        ) + b1
        h = jnp.maximum(h, 0.0)
        y = jnp.dot(
            h.astype(w2_ref.dtype), w2_ref[...],
            preferred_element_type=jnp.float32,
        ) + b2

        # ---- L2 normalization: single rsqrt + multiply ----
        inv_norm = jax.lax.rsqrt(
            jnp.sum(y * y, axis=-1, keepdims=True) + NORM_EPS
        )
        out_ref[...] = (y * inv_norm).astype(out_ref.dtype)


def custom_clip_forward(image, params, *, tk=512):
    """image: (B, C, H, W) float32 NCHW. Returns (image_features (B, D), logit_scale scalar)."""
    B = image.shape[0]
    D = params["w2t"].shape[1]
    x_flat = image.reshape(B, -1).astype(jnp.float32)
    Din = x_flat.shape[1]

    # ---- parameter prep (outside the kernel) ----
    # BatchNorm2d eval-mode fold into conv1.
    bn_scale = params["gamma"] * jax.lax.rsqrt(params["rvar"] + BN_EPS)          # (1, D)
    w1_folded = params["w1t"] * bn_scale                                          # per-out-col
    b1_folded = (params["b1"] - params["rmean"]) * bn_scale + params["beta"]      # (1, D)

    # Visual-prompt contribution: vbias = mean(vctx) @ w_vp, folded through conv1 into b1.
    vmean = jnp.mean(params["vctx"], axis=0, keepdims=True).astype(jnp.float32)   # (1, Hvp)
    vbias = vmean @ params["w_vp"]                                                # (1, D)
    b1_eff = b1_folded + vbias @ w1_folded                                        # (1, D)
    bias_pack = jnp.concatenate([b1_eff, params["b2"]], axis=0).astype(jnp.float32)  # (2, D)

    # bf16 weights / activations, f32 accumulation.
    w1 = w1_folded.astype(jnp.bfloat16)
    w2 = params["w2t"].astype(jnp.bfloat16)
    w_enc = params["w_enc"].astype(jnp.bfloat16)

    # ---- padding / tiling ----
    tb = min(128, _round_up(B, 8))          # MXU-friendly row tile, >= f32 sublane
    B_pad = _round_up(B, tb)
    tk_eff = min(tk, _round_up(Din, 128))   # K tile, lane-aligned
    Din_pad = _round_up(Din, tk_eff)

    x_p = jnp.zeros((B_pad, Din_pad), jnp.bfloat16)
    x_p = x_p.at[:B, :Din].set(x_flat.astype(jnp.bfloat16))
    w_enc_p = jnp.zeros((Din_pad, D), jnp.bfloat16).at[:Din, :].set(w_enc)

    grid = (B_pad // tb, Din_pad // tk_eff)

    feats_pad = pl.pallas_call(
        _custom_clip_kernel,
        out_shape=jax.ShapeDtypeStruct((B_pad, D), jnp.float32),
        grid_spec=pltpu.PrefetchScalarGridSpec(
            num_scalar_prefetch=0,
            grid=grid,
            in_specs=[
                pl.BlockSpec((tb, tk_eff), lambda i, k: (i, k)),   # x tile
                pl.BlockSpec((tk_eff, D), lambda i, k: (k, 0)),    # w_enc tile (streamed)
                pl.BlockSpec((D, D), lambda i, k: (0, 0)),         # w1 (resident)
                pl.BlockSpec((D, D), lambda i, k: (0, 0)),         # w2 (resident)
                pl.BlockSpec((2, D), lambda i, k: (0, 0)),         # packed biases
            ],
            out_specs=pl.BlockSpec((tb, D), lambda i, k: (i, 0)),
            scratch_shapes=[pltpu.VMEM((tb, D), jnp.float32)],
        ),
        compiler_params=pltpu.CompilerParams(
            dimension_semantics=("parallel", "arbitrary"),
        ),
    )(x_p, w_enc_p, w1, w2, bias_pack)

    feats = feats_pad[:B]
    logit_scale = jnp.exp(params["logit_scale"])  # scalar glue, outside the kernel
    return feats, logit_scale


def init_params(key, *, img_flat_dim, feat_dim=512, n_ctx=4, hidden_size=32):
    """Deterministic synthetic parameters matching the module's shapes."""
    ks = jax.random.split(key, 6)
    p = {}
    # PromptLearner.vctx: (n_ctx, hidden_size), normal std=0.02
    p["vctx"] = 0.02 * jax.random.normal(ks[0], (n_ctx, hidden_size), jnp.float32)
    # stub image-encoder projections
    p["w_enc"] = 0.02 * jax.random.normal(ks[1], (img_flat_dim, feat_dim), jnp.float32)
    p["w_vp"] = 0.02 * jax.random.normal(ks[2], (hidden_size, feat_dim), jnp.float32)
    # Feature_Trans_Module_two_layer(512, 512):
    #   conv1: Conv2d(512, 512, 1) -> weight stored pre-transposed (in, out)
    p["w1t"] = 0.02 * jax.random.normal(ks[3], (feat_dim, feat_dim), jnp.float32)
    p["b1"] = jnp.zeros((1, feat_dim), jnp.float32)
    #   BatchNorm2d(512) eval-mode params (identity init)
    p["gamma"] = jnp.ones((1, feat_dim), jnp.float32)
    p["beta"] = jnp.zeros((1, feat_dim), jnp.float32)
    p["rmean"] = jnp.zeros((1, feat_dim), jnp.float32)
    p["rvar"] = jnp.ones((1, feat_dim), jnp.float32)
    #   conv2: Conv2d(512, 512, 1)
    p["w2t"] = 0.02 * jax.random.normal(ks[4], (feat_dim, feat_dim), jnp.float32)
    p["b2"] = jnp.zeros((1, feat_dim), jnp.float32)
    # clip_model.logit_scale init = ln(1/0.07)
    p["logit_scale"] = jnp.asarray(jnp.log(1.0 / 0.07), jnp.float32)
    return p


def _reference_forward(image, params):
    """Pure-JAX f32 reference with the same (stub-encoder) semantics, for sanity check."""
    B = image.shape[0]
    x = image.reshape(B, -1).astype(jnp.float32)
    vmean = jnp.mean(params["vctx"], axis=0, keepdims=True)
    feats = x @ params["w_enc"] + vmean @ params["w_vp"]
    h = feats @ params["w1t"] + params["b1"]
    inv_std = jax.lax.rsqrt(params["rvar"] + BN_EPS)
    h = (h - params["rmean"]) * inv_std * params["gamma"] + params["beta"]
    h = jnp.maximum(h, 0.0)
    y = h @ params["w2t"] + params["b2"]
    return y / jnp.linalg.norm(y, axis=-1, keepdims=True)


if __name__ == "__main__":
    key = jax.random.PRNGKey(0)
    k_img, k_par = jax.random.split(key)

    # Small synthetic shapes: image (B=2, C=4, H=16, W=16), NCHW.
    B, C, H, W = 2, 4, 16, 16
    image = jax.random.normal(k_img, (B, C, H, W), jnp.float32)

    params = init_params(k_par, img_flat_dim=C * H * W, feat_dim=512,
                         n_ctx=4, hidden_size=32)

    feats, logit_scale = jax.jit(custom_clip_forward)(image, params)
    feats = jax.block_until_ready(feats)
    logit_scale = jax.block_until_ready(logit_scale)

    # sanity: shapes, unit norms, logit_scale = exp(ln(1/0.07))
    assert feats.shape == (B, 512)
    norms = jnp.linalg.norm(feats, axis=-1)
    assert bool(jnp.allclose(norms, 1.0, atol=1e-3)), f"norms off: {norms}"
    assert bool(jnp.allclose(logit_scale, 1.0 / 0.07, rtol=1e-4))

    # sanity vs. f32 pure-JAX reference (bf16 weights -> loose cosine check)
    ref = _reference_forward(image, params)
    cos = jnp.sum(feats * ref, axis=-1)
    assert bool(jnp.all(cos > 0.99)), f"cosine vs reference too low: {cos}"

    print("KERNEL_OK")
</pallas_src>

<mosaic_0001>
module attributes {stable_mosaic.version = 11 : i64} {
  func.func @_custom_clip_kernel(%arg0: i32, %arg1: i32, %arg2: memref<8x512xbf16, #tpu.memory_space<vmem>>, %arg3: memref<512x512xbf16, #tpu.memory_space<vmem>>, %arg4: memref<512x512xbf16, #tpu.memory_space<vmem>>, %arg5: memref<512x512xbf16, #tpu.memory_space<vmem>>, %arg6: memref<2x512xf32, #tpu.memory_space<vmem>>, %arg7: memref<8x512xf32, #tpu.memory_space<vmem>>, %arg8: memref<8x512xf32, #tpu.memory_space<vmem>>) attributes {dimension_semantics = [#tpu.dimension_semantics<parallel>, #tpu.dimension_semantics<arbitrary>], iteration_bounds = array<i64: 1, 2>, scalar_prefetch = 0 : i64, scratch_operands = 1 : i64, tpu.core_type = #tpu.core_type<tc>, window_params = [{transform_indices = @transform_0, window_bounds = array<i64: 8, 512>}, {transform_indices = @transform_1, window_bounds = array<i64: 512, 512>}, {pipeline_mode = #tpu.pipeline_mode<synchronous>, transform_indices = @transform_2, window_bounds = array<i64: 512, 512>}, {pipeline_mode = #tpu.pipeline_mode<synchronous>, transform_indices = @transform_3, window_bounds = array<i64: 512, 512>}, {pipeline_mode = #tpu.pipeline_mode<synchronous>, transform_indices = @transform_4, window_bounds = array<i64: 2, 512>}, {transform_indices = @transform_5, window_bounds = array<i64: 8, 512>}]} {
    %c0_i32 = arith.constant 0 : i32
    %0 = arith.cmpi eq, %arg1, %c0_i32 : i32
    %1 = arith.extui %0 : i1 to i32
    %c0_i32_0 = arith.constant 0 : i32
    %2 = arith.cmpi ne, %1, %c0_i32_0 : i32
    scf.if %2 {
      %cst_9 = arith.constant 0.000000e+00 : f32
      %12 = vector.broadcast %cst_9 : f32 to vector<8x512xf32>
      %c0_10 = arith.constant 0 : index
      %c0_11 = arith.constant 0 : index
      %13 = vector.load %arg8[%c0_10, %c0_11] : memref<8x512xf32, #tpu.memory_space<vmem>>, vector<8x512xf32>
      tpu.vector_store %arg8[%c0_10, %c0_11], %12 {strides = array<i32>} : memref<8x512xf32, #tpu.memory_space<vmem>>, vector<8x512xf32>,
    } else {
    }
    %c0 = arith.constant 0 : index
    %c0_1 = arith.constant 0 : index
    %3 = vector.load %arg8[%c0, %c0_1] : memref<8x512xf32, #tpu.memory_space<vmem>>, vector<8x512xf32>
    %c0_2 = arith.constant 0 : index
    %c0_3 = arith.constant 0 : index
    %4 = vector.load %arg2[%c0_2, %c0_3] : memref<8x512xbf16, #tpu.memory_space<vmem>>, vector<8x512xbf16>
    %c0_4 = arith.constant 0 : index
    %c0_5 = arith.constant 0 : index
    %5 = vector.load %arg3[%c0_4, %c0_5] : memref<512x512xbf16, #tpu.memory_space<vmem>>, vector<512x512xbf16>
    %cst = arith.constant dense<0.000000e+00> : vector<8x512xf32>
    %6 = tpu.matmul %4, %5, %cst {dimension_numbers = #tpu.dot_dimension_numbers<[1], [0], [0], [1], [0, 0, 1, 1], [], []>} : vector<8x512xbf16>, vector<512x512xbf16>, vector<8x512xf32> -> vector<8x512xf32>
    %7 = arith.addf %3, %6 : vector<8x512xf32>
    %c0_6 = arith.constant 0 : index
    %c0_7 = arith.constant 0 : index
    %8 = vector.load %arg8[%c0_6, %c0_7] : memref<8x512xf32, #tpu.memory_space<vmem>>, vector<8x512xf32>
    tpu.vector_store %arg8[%c0_6, %c0_7], %7 {strides = array<i32>} : memref<8x512xf32, #tpu.memory_space<vmem>>, vector<8x512xf32>,
    %c1_i32 = arith.constant 1 : i32
    %9 = arith.cmpi eq, %arg1, %c1_i32 : i32
    %10 = arith.extui %9 : i1 to i32
    %c0_i32_8 = arith.constant 0 : i32
    %11 = arith.cmpi ne, %10, %c0_i32_8 : i32
    scf.if %11 {
      %c0_9 = arith.constant 0 : index
      %c0_10 = arith.constant 0 : index
      %12 = vector.load %arg8[%c0_9, %c0_10] : memref<8x512xf32, #tpu.memory_space<vmem>>, vector<8x512xf32>
      %c0_11 = arith.constant 0 : index
      %c0_12 = arith.constant 0 : index
      %13 = vector.load %arg6[%c0_11, %c0_12] : memref<2x512xf32, #tpu.memory_space<vmem>>, vector<1x512xf32>
      %c1 = arith.constant 1 : index
      %c0_13 = arith.constant 0 : index
      %14 = vector.load %arg6[%c1, %c0_13] : memref<2x512xf32, #tpu.memory_space<vmem>>, vector<1x512xf32>
      %15 = arith.truncf %12 : vector<8x512xf32> to vector<8x512xbf16>
      %c0_14 = arith.constant 0 : index
      %c0_15 = arith.constant 0 : index
      %16 = vector.load %arg4[%c0_14, %c0_15] : memref<512x512xbf16, #tpu.memory_space<vmem>>, vector<512x512xbf16>
      %cst_16 = arith.constant dense<0.000000e+00> : vector<8x512xf32>
      %17 = tpu.matmul %15, %16, %cst_16 {dimension_numbers = #tpu.dot_dimension_numbers<[1], [0], [0], [1], [0, 0, 1, 1], [], []>} : vector<8x512xbf16>, vector<512x512xbf16>, vector<8x512xf32> -> vector<8x512xf32>
      %18 = vector.broadcast %13 : vector<1x512xf32> to vector<8x512xf32>
      %19 = arith.addf %17, %18 : vector<8x512xf32>
      %cst_17 = arith.constant 0.000000e+00 : f32
      %20 = vector.broadcast %cst_17 : f32 to vector<8x512xf32>
      %21 = arith.maximumf %19, %20 : vector<8x512xf32>
      %22 = arith.truncf %21 : vector<8x512xf32> to vector<8x512xbf16>
      %c0_18 = arith.constant 0 : index
      %c0_19 = arith.constant 0 : index
      %23 = vector.load %arg5[%c0_18, %c0_19] : memref<512x512xbf16, #tpu.memory_space<vmem>>, vector<512x512xbf16>
      %cst_20 = arith.constant dense<0.000000e+00> : vector<8x512xf32>
      %24 = tpu.matmul %22, %23, %cst_20 {dimension_numbers = #tpu.dot_dimension_numbers<[1], [0], [0], [1], [0, 0, 1, 1], [], []>} : vector<8x512xbf16>, vector<512x512xbf16>, vector<8x512xf32> -> vector<8x512xf32>
      %25 = vector.broadcast %14 : vector<1x512xf32> to vector<8x512xf32>
      %26 = arith.addf %24, %25 : vector<8x512xf32>
      %27 = arith.mulf %26, %26 : vector<8x512xf32>
      %cst_21 = arith.constant dense<0.000000e+00> : vector<8xf32>
      %28 = vector.multi_reduction <add>, %27, %cst_21 [1] : vector<8x512xf32> to vector<8xf32>
      %29 = vector.shape_cast %28 : vector<8xf32> to vector<8x1xf32>
      %cst_22 = arith.constant 9.99999996E-13 : f32
      %30 = vector.broadcast %cst_22 : f32 to vector<8x1xf32>
      %31 = arith.addf %29, %30 : vector<8x1xf32>
      %32 = math.rsqrt %31 : vector<8x1xf32>
      %33 = vector.broadcast %32 : vector<8x1xf32> to vector<8x512xf32>
      %34 = arith.mulf %26, %33 : vector<8x512xf32>
      %c0_23 = arith.constant 0 : index
      %c0_24 = arith.constant 0 : index
      %35 = vector.load %arg7[%c0_23, %c0_24] : memref<8x512xf32, #tpu.memory_space<vmem>>, vector<8x512xf32>
      tpu.vector_store %arg7[%c0_23, %c0_24], %34 {strides = array<i32>} : memref<8x512xf32, #tpu.memory_space<vmem>>, vector<8x512xf32>,
    } else {
    }
    return
  }
  func.func @transform_0(%arg0: i32, %arg1: i32) -> (i32, i32) {
    %c0_i32 = arith.constant 0 : i32
    return %arg0, %arg1 : i32, i32
  }
  func.func @transform_1(%arg0: i32, %arg1: i32) -> (i32, i32) {
    %c0_i32 = arith.constant 0 : i32
    %c0_i32_0 = arith.constant 0 : i32
    return %arg1, %c0_i32 : i32, i32
  }
  func.func @transform_2(%arg0: i32, %arg1: i32) -> (i32, i32) {
    %c0_i32 = arith.constant 0 : i32
    %c0_i32_0 = arith.constant 0 : i32
    %c0_i32_1 = arith.constant 0 : i32
    return %c0_i32, %c0_i32_0 : i32, i32
  }
  func.func @transform_3(%arg0: i32, %arg1: i32) -> (i32, i32) {
    %c0_i32 = arith.constant 0 : i32
    %c0_i32_0 = arith.constant 0 : i32
    %c0_i32_1 = arith.constant 0 : i32
    return %c0_i32, %c0_i32_0 : i32, i32
  }
  func.func @transform_4(%arg0: i32, %arg1: i32) -> (i32, i32) {
    %c0_i32 = arith.constant 0 : i32
    %c0_i32_0 = arith.constant 0 : i32
    %c0_i32_1 = arith.constant 0 : i32
    return %c0_i32, %c0_i32_0 : i32, i32
  }
  func.func @transform_5(%arg0: i32, %arg1: i32) -> (i32, i32) {
    %c0_i32 = arith.constant 0 : i32
    %c0_i32_0 = arith.constant 0 : i32
    return %arg0, %c0_i32 : i32, i32
  }
}

</mosaic_0001>

<llo_original>
// kernel: custom_clip_forward.1
$region0: #{custom_clip_forward.1}
  #allocation0 [shape = 'u32[]', space=smem, size = 0x4, offset = 0x4, fixed_abs, tag = 'smem constant byte address 0x4 - core index']
  #allocation1 [shape = 'u32[144,128]{1,0:T(1,128)}', space=vmem, size = 0x12000, scoped, tag = 'internal scratch']
  #allocation2 [shape = 'f32[8,512]{1,0:T(8,128)}', space=vmem, size = 0x4000, scoped, tag = 'scratch operand']
  %s0 = inlined_call_operand.vmem [shape: bf16[8,1024], index: 0, kind: input, shape index: {}]
  %s1 = inlined_call_operand.vmem [shape: bf16[1024,512], index: 1, kind: input, shape index: {}]
  %s2 = inlined_call_operand.vmem [shape: bf16[512,512], index: 2, kind: input, shape index: {}]
  %s3 = inlined_call_operand.vmem [shape: bf16[512,512], index: 3, kind: input, shape index: {}]
  %s4 = inlined_call_operand.vmem [shape: f32[2,512], index: 4, kind: input, shape index: {}]
  %s5 = inlined_call_operand.vmem [shape: f32[8,512], index: 5, kind: output, shape index: {}]
  %s6 = sld [smem:[#allocation0]]
  $region61: #{custom_clip_forward.1} parent=0
    _
  %s8 = ssub.s32 1, %s6
  %s9 = scalar_select 0, %s8, %s6
  loop: start=0, step=1, limit=4
  $region2: #{custom_clip_forward.1} parent=0 // loop_pre_header
    _
  $region3: #{custom_clip_forward.1} parent=0 // loop_header
    %s11 = sphi 0, %s15
    %p12 = scmp.ge.s32.totalorder %s11, 4
    %s18 = sphi 0, %s30
    %s19 = sphi 0, %s26
    %s20 = sphi 0, %s18
    %s21 = sphi 0, %s19
    %s22 = sphi 0, %s20
    %s23 = sphi 0, %s21
    %s35 = sphi 0, %s37
    %s38 = sphi 0, %s35
    %s39 = sphi 0, %s38
    %s55 = sphi 0, %s39
    %s61 = sphi 0, %s63
    %s64 = sphi 0, %s61
    %s65 = sphi 0, %s64
    %s81 = sphi 0, %s65
    %s85 = sphi 0, %s85
    %s87 = sphi 0, %s85
    %s88 = sphi 0, %s87
    %s102 = sphi 0, %s88
    %s106 = sphi 0, %s106
    %s108 = sphi 0, %s106
    %s109 = sphi 0, %s108
    %s123 = sphi 0, %s109
    %s127 = sphi 0, %s127
    %s129 = sphi 0, %s127
    %s130 = sphi 0, %s129
    %s144 = sphi 0, %s130
    %s150 = sphi 0, %s152
    %s153 = sphi 0, %s150
    %s154 = sphi 0, %s153
    %s170 = sphi 0, %s154
  $region4: #{custom_clip_forward.1} parent=0 // loop_header_branch
    %14 = sbr.rel (%p12) target = $region8
  $region5: #{custom_clip_forward.1} parent=0 // loop_body
    %s16 = ssub.s32 %s11, 1
    %s17 = ssub.s32 %s11, 2
    %s24 = sadd.s32 1, %s19
    %p25 = scmp.ge.s32.totalorder %s24, 2
    %s26 = scalar_select %p25, 0, %s24
    %s27 = sadd.s32 1, %s18
    %s28 = scalar_select %p25, %s27, %s18
    %p29 = scmp.ge.s32.totalorder %s28, 1
    %s30 = scalar_select %p29, 0, %s28
    %s31 = ssub.s32 %s18, %s30
    %s32 = ssub.s32 %s19, %s26
    %s33 = sor.u32 %s31, %s32
    %p34 = scmp.eq.s32.totalorder %s33, 0
    %s36 = sadd.s32 %s35, 1
    %s37 = scalar_select %p34, %s35, %s36
    %p40 = pneg %p34
    %p41 = scmp.eq.s32.totalorder %s11, 1
    %p42 = por %p40, %p41
    %p43 = scmp.ne.s32.totalorder %s35, %s38
    %p44 = scmp.eq.s32.totalorder %s11, 0
    %p45 = por %p43, %p44
    %p46 = scmp.ne.s32.totalorder %s35, %s38
    %p47 = scmp.eq.s32.totalorder %s16, 1
    %p48 = por %p46, %p47
    %p49 = scmp.ne.s32.totalorder %s38, %s39
    %p50 = scmp.eq.s32.totalorder %s16, 0
    %p51 = por %p49, %p50
    %p52 = scmp.ne.s32.totalorder %s38, %s39
    %p53 = scmp.eq.s32.totalorder %s17, 1
    %p54 = por %p52, %p53
    %p56 = scmp.ne.s32.totalorder %s39, %s55
    %p57 = scmp.eq.s32.totalorder %s17, 0
    %p58 = por %p56, %p57
    %s59 = ssub.s32 %s19, %s26
    %p60 = scmp.eq.s32.totalorder %s59, 0
    %s62 = sadd.s32 %s61, 1
    %s63 = scalar_select %p60, %s61, %s62
    %p66 = pneg %p60
    %p67 = scmp.eq.s32.totalorder %s11, 1
    %p68 = por %p66, %p67
    %p69 = scmp.ne.s32.totalorder %s61, %s64
    %p70 = scmp.eq.s32.totalorder %s11, 0
    %p71 = por %p69, %p70
    %p72 = scmp.ne.s32.totalorder %s61, %s64
    %p73 = scmp.eq.s32.totalorder %s16, 1
    %p74 = por %p72, %p73
    %p75 = scmp.ne.s32.totalorder %s64, %s65
    %p76 = scmp.eq.s32.totalorder %s16, 0
    %p77 = por %p75, %p76
    %p78 = scmp.ne.s32.totalorder %s64, %s65
    %p79 = scmp.eq.s32.totalorder %s17, 1
    %p80 = por %p78, %p79
    %p82 = scmp.ne.s32.totalorder %s65, %s81
    %p83 = scmp.eq.s32.totalorder %s17, 0
    %p84 = por %p82, %p83
    %s86 = sadd.s32 %s85, 1
    %p89 = scmp.eq.s32.totalorder %s11, 1
    %p90 = scmp.ne.s32.totalorder %s85, %s87
    %p91 = scmp.eq.s32.totalorder %s11, 0
    %p92 = por %p90, %p91
    %p93 = scmp.ne.s32.totalorder %s85, %s87
    %p94 = scmp.eq.s32.totalorder %s16, 1
    %p95 = por %p93, %p94
    %p96 = scmp.ne.s32.totalorder %s87, %s88
    %p97 = scmp.eq.s32.totalorder %s16, 0
    %p98 = por %p96, %p97
    %p99 = scmp.ne.s32.totalorder %s87, %s88
    %p100 = scmp.eq.s32.totalorder %s17, 1
    %p101 = por %p99, %p100
    %p103 = scmp.ne.s32.totalorder %s88, %s102
    %p104 = scmp.eq.s32.totalorder %s17, 0
    %p105 = por %p103, %p104
    %s107 = sadd.s32 %s106, 1
    %p110 = scmp.eq.s32.totalorder %s11, 1
    %p111 = scmp.ne.s32.totalorder %s106, %s108
    %p112 = scmp.eq.s32.totalorder %s11, 0
    %p113 = por %p111, %p112
    %p114 = scmp.ne.s32.totalorder %s106, %s108
    %p115 = scmp.eq.s32.totalorder %s16, 1
    %p116 = por %p114, %p115
    %p117 = scmp.ne.s32.totalorder %s108, %s109
    %p118 = scmp.eq.s32.totalorder %s16, 0
    %p119 = por %p117, %p118
    %p120 = scmp.ne.s32.totalorder %s108, %s109
    %p121 = scmp.eq.s32.totalorder %s17, 1
    %p122 = por %p120, %p121
    %p124 = scmp.ne.s32.totalorder %s109, %s123
    %p125 = scmp.eq.s32.totalorder %s17, 0
    %p126 = por %p124, %p125
    %s128 = sadd.s32 %s127, 1
    %p131 = scmp.eq.s32.totalorder %s11, 1
    %p132 = scmp.ne.s32.totalorder %s127, %s129
    %p133 = scmp.eq.s32.totalorder %s11, 0
    %p134 = por %p132, %p133
    %p135 = scmp.ne.s32.totalorder %s127, %s129
    %p136 = scmp.eq.s32.totalorder %s16, 1
    %p137 = por %p135, %p136
    %p138 = scmp.ne.s32.totalorder %s129, %s130
    %p139 = scmp.eq.s32.totalorder %s16, 0
    %p140 = por %p138, %p139
    %p141 = scmp.ne.s32.totalorder %s129, %s130
    %p142 = scmp.eq.s32.totalorder %s17, 1
    %p143 = por %p141, %p142
    %p145 = scmp.ne.s32.totalorder %s130, %s144
    %p146 = scmp.eq.s32.totalorder %s17, 0
    %p147 = por %p145, %p146
    %s148 = ssub.s32 %s18, %s30
    %p149 = scmp.eq.s32.totalorder %s148, 0
    %s151 = sadd.s32 %s150, 1
    %s152 = scalar_select %p149, %s150, %s151
    %p155 = pneg %p149
    %p156 = scmp.eq.s32.totalorder %s11, 1
    %p157 = por %p155, %p156
    %p158 = scmp.ne.s32.totalorder %s150, %s153
    %p159 = scmp.eq.s32.totalorder %s11, 0
    %p160 = por %p158, %p159
    %p161 = scmp.ne.s32.totalorder %s150, %s153
    %p162 = scmp.eq.s32.totalorder %s16, 1
    %p163 = por %p161, %p162
    %p164 = scmp.ne.s32.totalorder %s153, %s154
    %p165 = scmp.eq.s32.totalorder %s16, 0
    %p166 = por %p164, %p165
    %p167 = scmp.ne.s32.totalorder %s153, %s154
    %p168 = scmp.eq.s32.totalorder %s17, 1
    %p169 = por %p167, %p168
    %p171 = scmp.ne.s32.totalorder %s154, %s170
    %p172 = scmp.eq.s32.totalorder %s17, 0
    %p173 = por %p171, %p172
    %p174 = scmp.le.s32.totalorder 1, %s11
    %p175 = scmp.lt.s32.totalorder %s11, 3
    %p176 = pnand %p174, %p175
    %p177 = pneg %p176
    // Predicated region
    $region9: #{custom_clip_forward.1} parent=5 // pred_check
      _
    $region10: #{custom_clip_forward.1} parent=5 // pred_check_branch
      %179 = sbr.rel (%p176) target = $region12
    $region11: #{custom_clip_forward.1} parent=5 // pred_region
      %s180 = ssub.s32 %s11, 1
      // Predicated region
      $region13: #{custom_clip_forward.1} parent=11 // pred_check
        %p181 = pneg %p98
      $region14: #{custom_clip_forward.1} parent=11 // pred_check_branch
        %183 = sbr.rel (%p181) target = $region16
      $region15: #{custom_clip_forward.1} parent=11 // pred_region
        _
      $region16: #{custom_clip_forward.1} parent=11 // pred_fallthru
        _
      // Predicated region
      $region17: #{custom_clip_forward.1} parent=11 // pred_check
        %p184 = pneg %p119
      $region18: #{custom_clip_forward.1} parent=11 // pred_check_branch
        %186 = sbr.rel (%p184) target = $region20
      $region19: #{custom_clip_forward.1} parent=11 // pred_region
        _
      $region20: #{custom_clip_forward.1} parent=11 // pred_fallthru
        _
      // Predicated region
      $region21: #{custom_clip_forward.1} parent=11 // pred_check
        %p187 = pneg %p140
      $region22: #{custom_clip_forward.1} parent=11 // pred_check_branch
        %189 = sbr.rel (%p187) target = $region24
      $region23: #{custom_clip_forward.1} parent=11 // pred_region
        _
      $region24: #{custom_clip_forward.1} parent=11 // pred_fallthru
        _
    $region12: #{custom_clip_forward.1} parent=5 // pred_fallthru
      _
    %p190 = scmp.lt.s32.totalorder %s11, 2
    // Predicated region
    $region25: #{custom_clip_forward.1} parent=5 // pred_check
      %p191 = pneg %p190
    $region26: #{custom_clip_forward.1} parent=5 // pred_check_branch
      %193 = sbr.rel (%p191) target = $region28
    $region27: #{custom_clip_forward.1} parent=5 // pred_region
      // Predicated region
      $region29: #{custom_clip_forward.1} parent=27 // pred_check
        %p194 = pneg %p45
      $region30: #{custom_clip_forward.1} parent=27 // pred_check_branch
        %196 = sbr.rel (%p194) target = $region32
      $region31: #{custom_clip_forward.1} parent=27 // pred_region
        %s197 = smul.u32 4, %s19
        %p198 = scmp.lt.s32.totalorder %s18, 0
        %s199 = scalar_select %p198, %s18, 0
        %p200 = scmp.lt.s32.totalorder %s197, 7
        %s201 = scalar_select %p200, %s197, 7
        %s202 = smul.addr %s199, 8
        %s203 = sadd.s32 %s201, %s202
        %s204 = smul.addr %s203, 4
        %s205 = scalar_lea.vmem %s0, %s204
        %s206 = smul.u32 4, %s19
      $region32: #{custom_clip_forward.1} parent=27 // pred_fallthru
        _
      // Predicated region
      $region33: #{custom_clip_forward.1} parent=27 // pred_check
        %p207 = pneg %p71
      $region34: #{custom_clip_forward.1} parent=27 // pred_check_branch
        %209 = sbr.rel (%p207) target = $region36
      $region35: #{custom_clip_forward.1} parent=27 // pred_region
        %s210 = smul.u32 64, %s19
        %p211 = scmp.lt.s32.totalorder %s210, 127
        %s212 = scalar_select %p211, %s210, 127
        %s213 = smul.addr %s212, 4
        %s214 = smul.addr %s213, 4
        %s215 = scalar_lea.vmem %s1, %s214
        %s216 = smul.u32 64, %s19
      $region36: #{custom_clip_forward.1} parent=27 // pred_fallthru
        _
    $region28: #{custom_clip_forward.1} parent=5 // pred_fallthru
      _
    %p217 = scmp.le.s32.totalorder 1, %s11
    %p218 = scmp.lt.s32.totalorder %s11, 3
    %p219 = pnand %p217, %p218
    %p220 = pneg %p219
    // Predicated region
    $region37: #{custom_clip_forward.1} parent=5 // pred_check
      _
    $region38: #{custom_clip_forward.1} parent=5 // pred_check_branch
      %222 = sbr.rel (%p219) target = $region40
    $region39: #{custom_clip_forward.1} parent=5 // pred_region
      %s223 = ssub.s32 %s11, 1
      %s224 = smul.u32 4, %s21
      %p225 = scmp.lt.s32.totalorder %s20, 0
      %s226 = scalar_select %p225, %s20, 0
      %p227 = scmp.lt.s32.totalorder %s224, 7
      %s228 = scalar_select %p227, %s224, 7
      %s229 = smul.addr %s226, 8
      %s230 = sadd.s32 %s228, %s229
      %s231 = smul.addr %s230, 4
      %s232 = scalar_lea.vmem %s0, %s231
      %p233 = pneg %p51
      %p234 = pneg %p48
      %s235 = smul.u32 64, %s21
      %p236 = scmp.lt.s32.totalorder %s235, 127
      %s237 = scalar_select %p236, %s235, 127
      %s238 = smul.addr %s237, 4
      %s239 = smul.addr %s238, 4
      %s240 = scalar_lea.vmem %s1, %s239
      %p241 = pneg %p77
      %p242 = pneg %p74
      %p243 = pneg %p98
      %p244 = pneg %p95
      %p245 = pneg %p119
      %p246 = pneg %p116
      %p247 = pneg %p140
      %p248 = pneg %p137
      %p249 = pneg %p166
      %p250 = pneg %p163
      %p251 = scmp.lt.s32.totalorder %s20, 0
      %s252 = scalar_select %p251, %s20, 0
      %s253 = smul.addr %s252, 4
      %s254 = smul.addr %s253, 8
      %s255 = scalar_lea.vmem %s5, %s254
      %s256 = smul.u32 4, %s21
      %p257 = scmp.lt.s32.totalorder %s20, 0
      %s258 = scalar_select %p257, %s20, 0
      %p259 = scmp.lt.s32.totalorder %s256, 7
      %s260 = scalar_select %p259, %s256, 7
      %s261 = smul.addr %s258, 8
      %s262 = sadd.s32 %s260, %s261
      %s263 = smul.addr %s262, 4
      %s264 = scalar_lea.vmem %s0, %s263
      %s265 = smul.u32 4, %s21
      %s266 = smul.u32 64, %s21
      %p267 = scmp.lt.s32.totalorder %s266, 127
      %s268 = scalar_select %p267, %s266, 127
      %s269 = smul.addr %s268, 4
      %s270 = smul.addr %s269, 4
      %s271 = scalar_lea.vmem %s1, %s270
      %s272 = smul.u32 64, %s21
      %p273 = scmp.lt.s32.totalorder %s20, 0
      %s274 = scalar_select %p273, %s20, 0
      %s275 = smul.addr %s274, 4
      %s276 = smul.addr %s275, 8
      %s277 = scalar_lea.vmem %s5, %s276
      %p278 = scmp.eq.s32.totalorder %s21, 0
      // Predicated region
      $region41: #{custom_clip_forward.1} parent=39 // pred_check
        %p279 = pneg %p278
      $region42: #{custom_clip_forward.1} parent=39 // pred_check_branch
        %281 = sbr.rel (%p279) target = $region44
      $region43: #{custom_clip_forward.1} parent=39 // pred_region
        %282 = vst [vmem:[#allocation2] sm:$0xff] 0.0
        %283 = vst [vmem:[#allocation2 + $0x8] sm:$0xff] 0.0
        %284 = vst [vmem:[#allocation2 + $0x10] sm:$0xff] 0.0
        %285 = vst [vmem:[#allocation2 + $0x18] sm:$0xff] 0.0
      $region44: #{custom_clip_forward.1} parent=39 // pred_fallthru
        _
      %v286 = vld [vmem:[#allocation2] sm:$0xff]
      %v287 = vld [vmem:[#allocation2 + $0x8] sm:$0xff]
      %v288 = vld [vmem:[#allocation2 + $0x10] sm:$0xff]
      %v289 = vld [vmem:[#allocation2 + $0x18] sm:$0xff]
      %v290 = vld [vmem:[%s264] sm:$0xff]
      %v291 = vld [vmem:[%s264 + $0x8] sm:$0xff]
      %v292 = vld [vmem:[%s271] sm:$0xff]
      %v293 = vld [vmem:[%s271 + $0x8] sm:$0xff]
      %v294 = vld [vmem:[%s271 + $0x10] sm:$0xff]
      %v295 = vld [vmem:[%s271 + $0x18] sm:$0xff]
      %v296 = vld [vmem:[%s271 + $0x20] sm:$0xff]
      %v297 = vld [vmem:[%s271 + $0x28] sm:$0xff]
      %v298 = vld [vmem:[%s271 + $0x30] sm:$0xff]
      %v299 = vld [vmem:[%s271 + $0x38] sm:$0xff]
      %v300 = vld [vmem:[%s271 + $0x40] sm:$0xff]
      %v301 = vld [vmem:[%s271 + $0x48] sm:$0xff]
      %v302 = vld [vmem:[%s271 + $0x50] sm:$0xff]
      %v303 = vld [vmem:[%s271 + $0x58] sm:$0xff]
      %v304 = vld [vmem:[%s271 + $0x60] sm:$0xff]
      %v305 = vld [vmem:[%s271 + $0x68] sm:$0xff]
      %v306 = vld [vmem:[%s271 + $0x70] sm:$0xff]
      %v307 = vld [vmem:[%s271 + $0x78] sm:$0xff]
      %v308 = vld [vmem:[%s271 + $0x80] sm:$0xff]
      %v309 = vld [vmem:[%s271 + $0x88] sm:$0xff]
      %v310 = vld [vmem:[%s271 + $0x90] sm:$0xff]
      %v311 = vld [vmem:[%s271 + $0x98] sm:$0xff]
      %v312 = vld [vmem:[%s271 + $0xa0] sm:$0xff]
      %v313 = vld [vmem:[%s271 + $0xa8] sm:$0xff]
      %v314 = vld [vmem:[%s271 + $0xb0] sm:$0xff]
      %v315 = vld [vmem:[%s271 + $0xb8] sm:$0xff]
      %v316 = vld [vmem:[%s271 + $0xc0] sm:$0xff]
      %v317 = vld [vmem:[%s271 + $0xc8] sm:$0xff]
      %v318 = vld [vmem:[%s271 + $0xd0] sm:$0xff]
      %v319 = vld [vmem:[%s271 + $0xd8] sm:$0xff]
      %v320 = vld [vmem:[%s271 + $0xe0] sm:$0xff]
      %v321 = vld [vmem:[%s271 + $0xe8] sm:$0xff]
      %v322 = vld [vmem:[%s271 + $0xf0] sm:$0xff]
      %v323 = vld [vmem:[%s271 + $0xf8] sm:$0xff]
      %v324 = vld [vmem:[%s271 + $0x100] sm:$0xff]
      %v325 = vld [vmem:[%s271 + $0x108] sm:$0xff]
      %v326 = vld [vmem:[%s271 + $0x110] sm:$0xff]
      %v327 = vld [vmem:[%s271 + $0x118] sm:$0xff]
      %v328 = vld [vmem:[%s271 + $0x120] sm:$0xff]
      %v329 = vld [vmem:[%s271 + $0x128] sm:$0xff]
      %v330 = vld [vmem:[%s271 + $0x130] sm:$0xff]
      %v331 = vld [vmem:[%s271 + $0x138] sm:$0xff]
      %v332 = vld [vmem:[%s271 + $0x140] sm:$0xff]
      %v333 = vld [vmem:[%s271 + $0x148] sm:$0xff]
      %v334 = vld [vmem:[%s271 + $0x150] sm:$0xff]
      %v335 = vld [vmem:[%s271 + $0x158] sm:$0xff]
      %v336 = vld [vmem:[%s271 + $0x160] sm:$0xff]
      %v337 = vld [vmem:[%s271 + $0x168] sm:$0xff]
      %v338 = vld [vmem:[%s271 + $0x170] sm:$0xff]
      %v339 = vld [vmem:[%s271 + $0x178] sm:$0xff]
      %v340 = vld [vmem:[%s271 + $0x180] sm:$0xff]
      %v341 = vld [vmem:[%s271 + $0x188] sm:$0xff]
      %v342 = vld [vmem:[%s271 + $0x190] sm:$0xff]
      %v343 = vld [vmem:[%s271 + $0x198] sm:$0xff]
      %v344 = vld [vmem:[%s271 + $0x1a0] sm:$0xff]
      %v345 = vld [vmem:[%s271 + $0x1a8] sm:$0xff]
      %v346 = vld [vmem:[%s271 + $0x1b0] sm:$0xff]
      %v347 = vld [vmem:[%s271 + $0x1b8] sm:$0xff]
      %v348 = vld [vmem:[%s271 + $0x1c0] sm:$0xff]
      %v349 = vld [vmem:[%s271 + $0x1c8] sm:$0xff]
      %v350 = vld [vmem:[%s271 + $0x1d0] sm:$0xff]
      %v351 = vld [vmem:[%s271 + $0x1d8] sm:$0xff]
      %v352 = vld [vmem:[%s271 + $0x1e0] sm:$0xff]
      %v353 = vld [vmem:[%s271 + $0x1e8] sm:$0xff]
      %v354 = vld [vmem:[%s271 + $0x1f0] sm:$0xff]
      %v355 = vld [vmem:[%s271 + $0x1f8] sm:$0xff]
      %v356 = vld [vmem:[%s271 + $0x200] sm:$0xff]
      %v357 = vld [vmem:[%s271 + $0x208] sm:$0xff]
      %v358 = vld [vmem:[%s271 + $0x210] sm:$0xff]
      %v359 = vld [vmem:[%s271 + $0x218] sm:$0xff]
      %v360 = vld [vmem:[%s271 + $0x220] sm:$0xff]
      %v361 = vld [vmem:[%s271 + $0x228] sm:$0xff]
      %v362 = vld [vmem:[%s271 + $0x230] sm:$0xff]
      %v363 = vld [vmem:[%s271 + $0x238] sm:$0xff]
      %v364 = vld [vmem:[%s271 + $0x240] sm:$0xff]
      %v365 = vld [vmem:[%s271 + $0x248] sm:$0xff]
      %v366 = vld [vmem:[%s271 + $0x250] sm:$0xff]
      %v367 = vld [vmem:[%s271 + $0x258] sm:$0xff]
      %v368 = vld [vmem:[%s271 + $0x260] sm:$0xff]
      %v369 = vld [vmem:[%s271 + $0x268] sm:$0xff]
      %v370 = vld [vmem:[%s271 + $0x270] sm:$0xff]
      %v371 = vld [vmem:[%s271 + $0x278] sm:$0xff]
      %v372 = vld [vmem:[%s271 + $0x280] sm:$0xff]
      %v373 = vld [vmem:[%s271 + $0x288] sm:$0xff]
      %v374 = vld [vmem:[%s271 + $0x290] sm:$0xff]
      %v375 = vld [vmem:[%s271 + $0x298] sm:$0xff]
      %v376 = vld [vmem:[%s271 + $0x2a0] sm:$0xff]
      %v377 = vld [vmem:[%s271 + $0x2a8] sm:$0xff]
      %v378 = vld [vmem:[%s271 + $0x2b0] sm:$0xff]
      %v379 = vld [vmem:[%s271 + $0x2b8] sm:$0xff]
      %v380 = vld [vmem:[%s271 + $0x2c0] sm:$0xff]
      %v381 = vld [vmem:[%s271 + $0x2c8] sm:$0xff]
      %v382 = vld [vmem:[%s271 + $0x2d0] sm:$0xff]
      %v383 = vld [vmem:[%s271 + $0x2d8] sm:$0xff]
      %v384 = vld [vmem:[%s271 + $0x2e0] sm:$0xff]
      %v385 = vld [vmem:[%s271 + $0x2e8] sm:$0xff]
      %v386 = vld [vmem:[%s271 + $0x2f0] sm:$0xff]
      %v387 = vld [vmem:[%s271 + $0x2f8] sm:$0xff]
      %v388 = vld [vmem:[%s271 + $0x300] sm:$0xff]
      %v389 = vld [vmem:[%s271 + $0x308] sm:$0xff]
      %v390 = vld [vmem:[%s271 + $0x310] sm:$0xff]
      %v391 = vld [vmem:[%s271 + $0x318] sm:$0xff]
      %v392 = vld [vmem:[%s271 + $0x320] sm:$0xff]
      %v393 = vld [vmem:[%s271 + $0x328] sm:$0xff]
      %v394 = vld [vmem:[%s271 + $0x330] sm:$0xff]
      %v395 = vld [vmem:[%s271 + $0x338] sm:$0xff]
      %v396 = vld [vmem:[%s271 + $0x340] sm:$0xff]
      %v397 = vld [vmem:[%s271 + $0x348] sm:$0xff]
      %v398 = vld [vmem:[%s271 + $0x350] sm:$0xff]
      %v399 = vld [vmem:[%s271 + $0x358] sm:$0xff]
      %v400 = vld [vmem:[%s271 + $0x360] sm:$0xff]
      %v401 = vld [vmem:[%s271 + $0x368] sm:$0xff]
      %v402 = vld [vmem:[%s271 + $0x370] sm:$0xff]
      %v403 = vld [vmem:[%s271 + $0x378] sm:$0xff]
      %v404 = vld [vmem:[%s271 + $0x380] sm:$0xff]
      %v405 = vld [vmem:[%s271 + $0x388] sm:$0xff]
      %v406 = vld [vmem:[%s271 + $0x390] sm:$0xff]
      %v407 = vld [vmem:[%s271 + $0x398] sm:$0xff]
      %v408 = vld [vmem:[%s271 + $0x3a0] sm:$0xff]
      %v409 = vld [vmem:[%s271 + $0x3a8] sm:$0xff]
      %v410 = vld [vmem:[%s271 + $0x3b0] sm:$0xff]
      %v411 = vld [vmem:[%s271 + $0x3b8] sm:$0xff]
      %v412 = vld [vmem:[%s271 + $0x3c0] sm:$0xff]
      %v413 = vld [vmem:[%s271 + $0x3c8] sm:$0xff]
      %v414 = vld [vmem:[%s271 + $0x3d0] sm:$0xff]
      %v415 = vld [vmem:[%s271 + $0x3d8] sm:$0xff]
      %v416 = vld [vmem:[%s271 + $0x3e0] sm:$0xff]
      %v417 = vld [vmem:[%s271 + $0x3e8] sm:$0xff]
      %v418 = vld [vmem:[%s271 + $0x3f0] sm:$0xff]
      %v419 = vld [vmem:[%s271 + $0x3f8] sm:$0xff]
      %v422 = vunpack.c.l.b16 %v290
      %v423 = vunpack.c.h.b16 %v290
      %v424 = vunpack.c.l.b16 %v291
      %v425 = vunpack.c.h.b16 %v291
      %v426 = vpack.c.b16 %v422, %v422
      %v427 = vpack.c.b16 %v423, %v423
      %v428 = vpack.c.b16 %v424, %v424
      %v429 = vpack.c.b16 %v425, %v425
      %v562 = vunpack.c.l.b16 %v292
      %v563 = vunpack.c.h.b16 %v292
      %v564 = vunpack.c.l.b16 %v293
      %v565 = vunpack.c.h.b16 %v293
      %v566 = vunpack.c.l.b16 %v294
      %v567 = vunpack.c.h.b16 %v294
      %v568 = vunpack.c.l.b16 %v295
      %v569 = vunpack.c.h.b16 %v295
      %v570 = vunpack.c.l.b16 %v296
      %v571 = vunpack.c.h.b16 %v296
      %v572 = vunpack.c.l.b16 %v297
      %v573 = vunpack.c.h.b16 %v297
      %v574 = vunpack.c.l.b16 %v298
      %v575 = vunpack.c.h.b16 %v298
      %v576 = vunpack.c.l.b16 %v299
      %v577 = vunpack.c.h.b16 %v299
      %v578 = vunpack.c.l.b16 %v300
      %v579 = vunpack.c.h.b16 %v300
      %v580 = vunpack.c.l.b16 %v301
      %v581 = vunpack.c.h.b16 %v301
      %v582 = vunpack.c.l.b16 %v302
      %v583 = vunpack.c.h.b16 %v302
      %v584 = vunpack.c.l.b16 %v303
      %v585 = vunpack.c.h.b16 %v303
      %v586 = vunpack.c.l.b16 %v304
      %v587 = vunpack.c.h.b16 %v304
      %v588 = vunpack.c.l.b16 %v305
      %v589 = vunpack.c.h.b16 %v305
      %v590 = vunpack.c.l.b16 %v306
      %v591 = vunpack.c.h.b16 %v306
      %v592 = vunpack.c.l.b16 %v307
      %v593 = vunpack.c.h.b16 %v307
      %v594 = vunpack.c.l.b16 %v308
      %v595 = vunpack.c.h.b16 %v308
      %v596 = vunpack.c.l.b16 %v309
      %v597 = vunpack.c.h.b16 %v309
      %v598 = vunpack.c.l.b16 %v310
      %v599 = vunpack.c.h.b16 %v310
      %v600 = vunpack.c.l.b16 %v311
      %v601 = vunpack.c.h.b16 %v311
      %v602 = vunpack.c.l.b16 %v312
      %v603 = vunpack.c.h.b16 %v312
      %v604 = vunpack.c.l.b16 %v313
      %v605 = vunpack.c.h.b16 %v313
      %v606 = vunpack.c.l.b16 %v314
      %v607 = vunpack.c.h.b16 %v314
      %v608 = vunpack.c.l.b16 %v315
      %v609 = vunpack.c.h.b16 %v315
      %v610 = vunpack.c.l.b16 %v316
      %v611 = vunpack.c.h.b16 %v316
      %v612 = vunpack.c.l.b16 %v317
      %v613 = vunpack.c.h.b16 %v317
      %v614 = vunpack.c.l.b16 %v318
      %v615 = vunpack.c.h.b16 %v318
      %v616 = vunpack.c.l.b16 %v319
      %v617 = vunpack.c.h.b16 %v319
      %v618 = vunpack.c.l.b16 %v320
      %v619 = vunpack.c.h.b16 %v320
      %v620 = vunpack.c.l.b16 %v321
      %v621 = vunpack.c.h.b16 %v321
      %v622 = vunpack.c.l.b16 %v322
      %v623 = vunpack.c.h.b16 %v322
      %v624 = vunpack.c.l.b16 %v323
      %v625 = vunpack.c.h.b16 %v323
      %v626 = vunpack.c.l.b16 %v324
      %v627 = vunpack.c.h.b16 %v324
      %v628 = vunpack.c.l.b16 %v325
      %v629 = vunpack.c.h.b16 %v325
      %v630 = vunpack.c.l.b16 %v326
      %v631 = vunpack.c.h.b16 %v326
      %v632 = vunpack.c.l.b16 %v327
      %v633 = vunpack.c.h.b16 %v327
      %v634 = vunpack.c.l.b16 %v328
      %v635 = vunpack.c.h.b16 %v328
      %v636 = vunpack.c.l.b16 %v329
      %v637 = vunpack.c.h.b16 %v329
      %v638 = vunpack.c.l.b16 %v330
      %v639 = vunpack.c.h.b16 %v330
      %v640 = vunpack.c.l.b16 %v331
      %v641 = vunpack.c.h.b16 %v331
      %v642 = vunpack.c.l.b16 %v332
      %v643 = vunpack.c.h.b16 %v332
      %v644 = vunpack.c.l.b16 %v333
      %v645 = vunpack.c.h.b16 %v333
      %v646 = vunpack.c.l.b16 %v334
      %v647 = vunpack.c.h.b16 %v334
      %v648 = vunpack.c.l.b16 %v335
      %v649 = vunpack.c.h.b16 %v335
      %v650 = vunpack.c.l.b16 %v336
      %v651 = vunpack.c.h.b16 %v336
      %v652 = vunpack.c.l.b16 %v337
      %v653 = vunpack.c.h.b16 %v337
      %v654 = vunpack.c.l.b16 %v338
      %v655 = vunpack.c.h.b16 %v338
      %v656 = vunpack.c.l.b16 %v339
      %v657 = vunpack.c.h.b16 %v339
      %v658 = vunpack.c.l.b16 %v340
      %v659 = vunpack.c.h.b16 %v340
      %v660 = vunpack.c.l.b16 %v341
      %v661 = vunpack.c.h.b16 %v341
      %v662 = vunpack.c.l.b16 %v342
      %v663 = vunpack.c.h.b16 %v342
      %v664 = vunpack.c.l.b16 %v343
      %v665 = vunpack.c.h.b16 %v343
      %v666 = vunpack.c.l.b16 %v344
      %v667 = vunpack.c.h.b16 %v344
      %v668 = vunpack.c.l.b16 %v345
      %v669 = vunpack.c.h.b16 %v345
      %v670 = vunpack.c.l.b16 %v346
      %v671 = vunpack.c.h.b16 %v346
      %v672 = vunpack.c.l.b16 %v347
      %v673 = vunpack.c.h.b16 %v347
      %v674 = vunpack.c.l.b16 %v348
      %v675 = vunpack.c.h.b16 %v348
      %v676 = vunpack.c.l.b16 %v349
      %v677 = vunpack.c.h.b16 %v349
      %v678 = vunpack.c.l.b16 %v350
      %v679 = vunpack.c.h.b16 %v350
      %v680 = vunpack.c.l.b16 %v351
      %v681 = vunpack.c.h.b16 %v351
      %v682 = vunpack.c.l.b16 %v352
      %v683 = vunpack.c.h.b16 %v352
      %v684 = vunpack.c.l.b16 %v353
      %v685 = vunpack.c.h.b16 %v353
      %v686 = vunpack.c.l.b16 %v354
      %v687 = vunpack.c.h.b16 %v354
      %v688 = vunpack.c.l.b16 %v355
      %v689 = vunpack.c.h.b16 %v355
      %v690 = vunpack.c.l.b16 %v356
      %v691 = vunpack.c.h.b16 %v356
      %v692 = vunpack.c.l.b16 %v357
      %v693 = vunpack.c.h.b16 %v357
      %v694 = vunpack.c.l.b16 %v358
      %v695 = vunpack.c.h.b16 %v358
      %v696 = vunpack.c.l.b16 %v359
      %v697 = vunpack.c.h.b16 %v359
      %v698 = vunpack.c.l.b16 %v360
      %v699 = vunpack.c.h.b16 %v360
      %v700 = vunpack.c.l.b16 %v361
      %v701 = vunpack.c.h.b16 %v361
      %v702 = vunpack.c.l.b16 %v362
      %v703 = vunpack.c.h.b16 %v362
      %v704 = vunpack.c.l.b16 %v363
      %v705 = vunpack.c.h.b16 %v363
      %v706 = vunpack.c.l.b16 %v364
      %v707 = vunpack.c.h.b16 %v364
      %v708 = vunpack.c.l.b16 %v365
      %v709 = vunpack.c.h.b16 %v365
      %v710 = vunpack.c.l.b16 %v366
      %v711 = vunpack.c.h.b16 %v366
      %v712 = vunpack.c.l.b16 %v367
      %v713 = vunpack.c.h.b16 %v367
      %v714 = vunpack.c.l.b16 %v368
      %v715 = vunpack.c.h.b16 %v368
      %v716 = vunpack.c.l.b16 %v369
      %v717 = vunpack.c.h.b16 %v369
      %v718 = vunpack.c.l.b16 %v370
      %v719 = vunpack.c.h.b16 %v370
      %v720 = vunpack.c.l.b16 %v371
      %v721 = vunpack.c.h.b16 %v371
      %v722 = vunpack.c.l.b16 %v372
      %v723 = vunpack.c.h.b16 %v372
      %v724 = vunpack.c.l.b16 %v373
      %v725 = vunpack.c.h.b16 %v373
      %v726 = vunpack.c.l.b16 %v374
      %v727 = vunpack.c.h.b16 %v374
      %v728 = vunpack.c.l.b16 %v375
      %v729 = vunpack.c.h.b16 %v375
      %v730 = vunpack.c.l.b16 %v376
      %v731 = vunpack.c.h.b16 %v376
      %v732 = vunpack.c.l.b16 %v377
      %v733 = vunpack.c.h.b16 %v377
      %v734 = vunpack.c.l.b16 %v378
      %v735 = vunpack.c.h.b16 %v378
      %v736 = vunpack.c.l.b16 %v379
      %v737 = vunpack.c.h.b16 %v379
      %v738 = vunpack.c.l.b16 %v380
      %v739 = vunpack.c.h.b16 %v380
      %v740 = vunpack.c.l.b16 %v381
      %v741 = vunpack.c.h.b16 %v381
      %v742 = vunpack.c.l.b16 %v382
      %v743 = vunpack.c.h.b16 %v382
      %v744 = vunpack.c.l.b16 %v383
      %v745 = vunpack.c.h.b16 %v383
      %v746 = vunpack.c.l.b16 %v384
      %v747 = vunpack.c.h.b16 %v384
      %v748 = vunpack.c.l.b16 %v385
      %v749 = vunpack.c.h.b16 %v385
      %v750 = vunpack.c.l.b16 %v386
      %v751 = vunpack.c.h.b16 %v386
      %v752 = vunpack.c.l.b16 %v387
      %v753 = vunpack.c.h.b16 %v387
      %v754 = vunpack.c.l.b16 %v388
      %v755 = vunpack.c.h.b16 %v388
      %v756 = vunpack.c.l.b16 %v389
      %v757 = vunpack.c.h.b16 %v389
      %v758 = vunpack.c.l.b16 %v390
      %v759 = vunpack.c.h.b16 %v390
      %v760 = vunpack.c.l.b16 %v391
      %v761 = vunpack.c.h.b16 %v391
      %v762 = vunpack.c.l.b16 %v392
      %v763 = vunpack.c.h.b16 %v392
      %v764 = vunpack.c.l.b16 %v393
      %v765 = vunpack.c.h.b16 %v393
      %v766 = vunpack.c.l.b16 %v394
      %v767 = vunpack.c.h.b16 %v394
      %v768 = vunpack.c.l.b16 %v395
      %v769 = vunpack.c.h.b16 %v395
      %v770 = vunpack.c.l.b16 %v396
      %v771 = vunpack.c.h.b16 %v396
      %v772 = vunpack.c.l.b16 %v397
      %v773 = vunpack.c.h.b16 %v397
      %v774 = vunpack.c.l.b16 %v398
      %v775 = vunpack.c.h.b16 %v398
      %v776 = vunpack.c.l.b16 %v399
      %v777 = vunpack.c.h.b16 %v399
      %v778 = vunpack.c.l.b16 %v400
      %v779 = vunpack.c.h.b16 %v400
      %v780 = vunpack.c.l.b16 %v401
      %v781 = vunpack.c.h.b16 %v401
      %v782 = vunpack.c.l.b16 %v402
      %v783 = vunpack.c.h.b16 %v402
      %v784 = vunpack.c.l.b16 %v403
      %v785 = vunpack.c.h.b16 %v403
      %v786 = vunpack.c.l.b16 %v404
      %v787 = vunpack.c.h.b16 %v404
      %v788 = vunpack.c.l.b16 %v405
      %v789 = vunpack.c.h.b16 %v405
      %v790 = vunpack.c.l.b16 %v406
      %v791 = vunpack.c.h.b16 %v406
      %v792 = vunpack.c.l.b16 %v407
      %v793 = vunpack.c.h.b16 %v407
      %v794 = vunpack.c.l.b16 %v408
      %v795 = vunpack.c.h.b16 %v408
      %v796 = vunpack.c.l.b16 %v409
      %v797 = vunpack.c.h.b16 %v409
      %v798 = vunpack.c.l.b16 %v410
      %v799 = vunpack.c.h.b16 %v410
      %v800 = vunpack.c.l.b16 %v411
      %v801 = vunpack.c.h.b16 %v411
      %v802 = vunpack.c.l.b16 %v412
      %v803 = vunpack.c.h.b16 %v412
      %v804 = vunpack.c.l.b16 %v413
      %v805 = vunpack.c.h.b16 %v413
      %v806 = vunpack.c.l.b16 %v414
      %v807 = vunpack.c.h.b16 %v414
      %v808 = vunpack.c.l.b16 %v415
      %v809 = vunpack.c.h.b16 %v415
      %v810 = vunpack.c.l.b16 %v416
      %v811 = vunpack.c.h.b16 %v416
      %v812 = vunpack.c.l.b16 %v417
      %v813 = vunpack.c.h.b16 %v417
      %v814 = vunpack.c.l.b16 %v418
      %v815 = vunpack.c.h.b16 %v418
      %v816 = vunpack.c.l.b16 %v419
      %v817 = vunpack.c.h.b16 %v419
      %v818 = vpack.c.b16 %v566, %v562
      %v819 = vpack.c.b16 %v567, %v563
      %v820 = vpack.c.b16 %v568, %v564
      %v821 = vpack.c.b16 %v569, %v565
      %v822 = vpack.c.b16 %v574, %v570
      %v823 = vpack.c.b16 %v575, %v571
      %v824 = vpack.c.b16 %v576, %v572
      %v825 = vpack.c.b16 %v577, %v573
      %v826 = vpack.c.b16 %v582, %v578
      %v827 = vpack.c.b16 %v583, %v579
      %v828 = vpack.c.b16 %v584, %v580
      %v829 = vpack.c.b16 %v585, %v581
      %v830 = vpack.c.b16 %v590, %v586
      %v831 = vpack.c.b16 %v591, %v587
      %v832 = vpack.c.b16 %v592, %v588
      %v833 = vpack.c.b16 %v593, %v589
      %v834 = vpack.c.b16 %v598, %v594
      %v835 = vpack.c.b16 %v599, %v595
      %v836 = vpack.c.b16 %v600, %v596
      %v837 = vpack.c.b16 %v601, %v597
      %v838 = vpack.c.b16 %v606, %v602
      %v839 = vpack.c.b16 %v607, %v603
      %v840 = vpack.c.b16 %v608, %v604
      %v841 = vpack.c.b16 %v609, %v605
      %v842 = vpack.c.b16 %v614, %v610
      %v843 = vpack.c.b16 %v615, %v611
      %v844 = vpack.c.b16 %v616, %v612
      %v845 = vpack.c.b16 %v617, %v613
      %v846 = vpack.c.b16 %v622, %v618
      %v847 = vpack.c.b16 %v623, %v619
      %v848 = vpack.c.b16 %v624, %v620
      %v849 = vpack.c.b16 %v625, %v621
      %v850 = vpack.c.b16 %v630, %v626
      %v851 = vpack.c.b16 %v631, %v627
      %v852 = vpack.c.b16 %v632, %v628
      %v853 = vpack.c.b16 %v633, %v629
      %v854 = vpack.c.b16 %v638, %v634
      %v855 = vpack.c.b16 %v639, %v635
      %v856 = vpack.c.b16 %v640, %v636
      %v857 = vpack.c.b16 %v641, %v637
      %v858 = vpack.c.b16 %v646, %v642
      %v859 = vpack.c.b16 %v647, %v643
      %v860 = vpack.c.b16 %v648, %v644
      %v861 = vpack.c.b16 %v649, %v645
      %v862 = vpack.c.b16 %v654, %v650
      %v863 = vpack.c.b16 %v655, %v651
      %v864 = vpack.c.b16 %v656, %v652
      %v865 = vpack.c.b16 %v657, %v653
      %v866 = vpack.c.b16 %v662, %v658
      %v867 = vpack.c.b16 %v663, %v659
      %v868 = vpack.c.b16 %v664, %v660
      %v869 = vpack.c.b16 %v665, %v661
      %v870 = vpack.c.b16 %v670, %v666
      %v871 = vpack.c.b16 %v671, %v667
      %v872 = vpack.c.b16 %v672, %v668
      %v873 = vpack.c.b16 %v673, %v669
      %v874 = vpack.c.b16 %v678, %v674
      %v875 = vpack.c.b16 %v679, %v675
      %v876 = vpack.c.b16 %v680, %v676
      %v877 = vpack.c.b16 %v681, %v677
      %v878 = vpack.c.b16 %v686, %v682
      %v879 = vpack.c.b16 %v687, %v683
      %v880 = vpack.c.b16 %v688, %v684
      %v881 = vpack.c.b16 %v689, %v685
      %v882 = vpack.c.b16 %v694, %v690
      %v883 = vpack.c.b16 %v695, %v691
      %v884 = vpack.c.b16 %v696, %v692
      %v885 = vpack.c.b16 %v697, %v693
      %v886 = vpack.c.b16 %v702, %v698
      %v887 = vpack.c.b16 %v703, %v699
      %v888 = vpack.c.b16 %v704, %v700
      %v889 = vpack.c.b16 %v705, %v701
      %v890 = vpack.c.b16 %v710, %v706
      %v891 = vpack.c.b16 %v711, %v707
      %v892 = vpack.c.b16 %v712, %v708
      %v893 = vpack.c.b16 %v713, %v709
      %v894 = vpack.c.b16 %v718, %v714
      %v895 = vpack.c.b16 %v719, %v715
      %v896 = vpack.c.b16 %v720, %v716
      %v897 = vpack.c.b16 %v721, %v717
      %v898 = vpack.c.b16 %v726, %v722
      %v899 = vpack.c.b16 %v727, %v723
      %v900 = vpack.c.b16 %v728, %v724
      %v901 = vpack.c.b16 %v729, %v725
      %v902 = vpack.c.b16 %v734, %v730
      %v903 = vpack.c.b16 %v735, %v731
      %v904 = vpack.c.b16 %v736, %v732
      %v905 = vpack.c.b16 %v737, %v733
      %v906 = vpack.c.b16 %v742, %v738
      %v907 = vpack.c.b16 %v743, %v739
      %v908 = vpack.c.b16 %v744, %v740
      %v909 = vpack.c.b16 %v745, %v741
      %v910 = vpack.c.b16 %v750, %v746
      %v911 = vpack.c.b16 %v751, %v747
      %v912 = vpack.c.b16 %v752, %v748
      %v913 = vpack.c.b16 %v753, %v749
      %v914 = vpack.c.b16 %v758, %v754
      %v915 = vpack.c.b16 %v759, %v755
      %v916 = vpack.c.b16 %v760, %v756
      %v917 = vpack.c.b16 %v761, %v757
      %v918 = vpack.c.b16 %v766, %v762
      %v919 = vpack.c.b16 %v767, %v763
      %v920 = vpack.c.b16 %v768, %v764
      %v921 = vpack.c.b16 %v769, %v765
      %v922 = vpack.c.b16 %v774, %v770
      %v923 = vpack.c.b16 %v775, %v771
      %v924 = vpack.c.b16 %v776, %v772
      %v925 = vpack.c.b16 %v777, %v773
      %v926 = vpack.c.b16 %v782, %v778
      %v927 = vpack.c.b16 %v783, %v779
      %v928 = vpack.c.b16 %v784, %v780
      %v929 = vpack.c.b16 %v785, %v781
      %v930 = vpack.c.b16 %v790, %v786
      %v931 = vpack.c.b16 %v791, %v787
      %v932 = vpack.c.b16 %v792, %v788
      %v933 = vpack.c.b16 %v793, %v789
      %v934 = vpack.c.b16 %v798, %v794
      %v935 = vpack.c.b16 %v799, %v795
      %v936 = vpack.c.b16 %v800, %v796
      %v937 = vpack.c.b16 %v801, %v797
      %v938 = vpack.c.b16 %v806, %v802
      %v939 = vpack.c.b16 %v807, %v803
      %v940 = vpack.c.b16 %v808, %v804
      %v941 = vpack.c.b16 %v809, %v805
      %v942 = vpack.c.b16 %v814, %v810
      %v943 = vpack.c.b16 %v815, %v811
      %v944 = vpack.c.b16 %v816, %v812
      %v945 = vpack.c.b16 %v817, %v813
      %1074 = vmatprep.subr.bf16.mxu0 %v819
      %1075 = vmatpush1.bf16.msra.mxu0 %v818
      %1076 = vmatprep.subr.bf16.mxu0 %v823
      %1077 = vmatpush1.bf16.msra.mxu0 %v822
      %1078 = vmatprep.subr.bf16.mxu0 %v827
      %1079 = vmatpush1.bf16.msra.mxu0 %v826
      %1080 = vmatprep.subr.bf16.mxu0 %v831
      %1081 = vmatpush1.bf16.msra.mxu0 %v830
      %1082 = vmatprep.subr.bf16.mxu0 %v835
      %1083 = vmatpush1.bf16.msra.mxu0 %v834
      %1084 = vmatprep.subr.bf16.mxu0 %v839
      %1085 = vmatpush1.bf16.msra.mxu0 %v838
      %1086 = vmatprep.subr.bf16.mxu0 %v843
      %1087 = vmatpush1.bf16.msra.mxu0 %v842
      %1088 = vmatprep.subr.bf16.mxu0 %v847
      %1089 = vmatpush1.bf16.msra.mxu0 %v846
      %1090 = vmatprep.subr.bf16.mxu0 %v851
      %1091 = vmatpush1.bf16.msra.mxu0 %v850
      %1092 = vmatprep.subr.bf16.mxu0 %v855
      %1093 = vmatpush1.bf16.msra.mxu0 %v854
      %1094 = vmatprep.subr.bf16.mxu0 %v859
      %1095 = vmatpush1.bf16.msra.mxu0 %v858
      %1096 = vmatprep.subr.bf16.mxu0 %v863
      %1097 = vmatpush1.bf16.msra.mxu0 %v862
      %1098 = vmatprep.subr.bf16.mxu0 %v867
      %1099 = vmatpush1.bf16.msra.mxu0 %v866
      %1100 = vmatprep.subr.bf16.mxu0 %v871
      %1101 = vmatpush1.bf16.msra.mxu0 %v870
      %1102 = vmatprep.subr.bf16.mxu0 %v875
      %1103 = vmatpush1.bf16.msra.mxu0 %v874
      %1104 = vmatprep.subr.bf16.mxu0 %v879
      %1105 = vmatpush1.bf16.msra.mxu0 %v878
      %1106 = vmatprep.mubr.bf16.mxu0 %v427
      %1107 = vmatmul.mubr.bf16.gmra.mrb[0].mxu0 %v426
      %v1108 = vpop.f32.mrb[0].mxu0
      %v1109 = vadd.f32 0.0, %v1108
      %v1110 = vpop.f32.mrb[0].mxu0
      %v1111 = vadd.f32 0.0, %v1110
      %v1112 = vpop.f32.mrb[0].mxu0
      %v1113 = vpop.f32.mrb[0].mxu0
      %1114 = vdwg.mxu0
      %1115 = vmatprep.subr.bf16.mxu0 %v883
      %1116 = vmatpush1.bf16.msra.mxu0 %v882
      %1117 = vmatprep.subr.bf16.mxu0 %v887
      %1118 = vmatpush1.bf16.msra.mxu0 %v886
      %1119 = vmatprep.subr.bf16.mxu0 %v891
      %1120 = vmatpush1.bf16.msra.mxu0 %v890
      %1121 = vmatprep.subr.bf16.mxu0 %v895
      %1122 = vmatpush1.bf16.msra.mxu0 %v894
      %1123 = vmatprep.subr.bf16.mxu0 %v899
      %1124 = vmatpush1.bf16.msra.mxu0 %v898
      %1125 = vmatprep.subr.bf16.mxu0 %v903
      %1126 = vmatpush1.bf16.msra.mxu0 %v902
      %1127 = vmatprep.subr.bf16.mxu0 %v907
      %1128 = vmatpush1.bf16.msra.mxu0 %v906
      %1129 = vmatprep.subr.bf16.mxu0 %v911
      %1130 = vmatpush1.bf16.msra.mxu0 %v910
      %1131 = vmatprep.subr.bf16.mxu0 %v915
      %1132 = vmatpush1.bf16.msra.mxu0 %v914
      %1133 = vmatprep.subr.bf16.mxu0 %v919
      %1134 = vmatpush1.bf16.msra.mxu0 %v918
      %1135 = vmatprep.subr.bf16.mxu0 %v923
      %1136 = vmatpush1.bf16.msra.mxu0 %v922
      %1137 = vmatprep.subr.bf16.mxu0 %v927
      %1138 = vmatpush1.bf16.msra.mxu0 %v926
      %1139 = vmatprep.subr.bf16.mxu0 %v931
      %1140 = vmatpush1.bf16.msra.mxu0 %v930
      %1141 = vmatprep.subr.bf16.mxu0 %v935
      %1142 = vmatpush1.bf16.msra.mxu0 %v934
      %1143 = vmatprep.subr.bf16.mxu0 %v939
      %1144 = vmatpush1.bf16.msra.mxu0 %v938
      %1145 = vmatprep.subr.bf16.mxu0 %v943
      %1146 = vmatpush1.bf16.msra.mxu0 %v942
      %1147 = vmatprep.mubr.bf16.mxu0 %v429
      %1148 = vmatmul.mubr.bf16.gmra.mrb[0].mxu0 %v428
      %v1149 = vpop.f32.mrb[0].mxu0
      %v1150 = vadd.f32 %v1109, %v1149
      %v1151 = vpop.f32.mrb[0].mxu0
      %v1152 = vadd.f32 %v1111, %v1151
      %v1153 = vpop.f32.mrb[0].mxu0
      %v1154 = vpop.f32.mrb[0].mxu0
      %1155 = vdwg.mxu0
      %1156 = vmatprep.subr.bf16.mxu0 %v821
      %1157 = vmatpush1.bf16.msra.mxu0 %v820
      %1158 = vmatprep.subr.bf16.mxu0 %v825
      %1159 = vmatpush1.bf16.msra.mxu0 %v824
      %1160 = vmatprep.subr.bf16.mxu0 %v829
      %1161 = vmatpush1.bf16.msra.mxu0 %v828
      %1162 = vmatprep.subr.bf16.mxu0 %v833
      %1163 = vmatpush1.bf16.msra.mxu0 %v832
      %1164 = vmatprep.subr.bf16.mxu0 %v837
      %1165 = vmatpush1.bf16.msra.mxu0 %v836
      %1166 = vmatprep.subr.bf16.mxu0 %v841
      %1167 = vmatpush1.bf16.msra.mxu0 %v840
      %1168 = vmatprep.subr.bf16.mxu0 %v845
      %1169 = vmatpush1.bf16.msra.mxu0 %v844
      %1170 = vmatprep.subr.bf16.mxu0 %v849
      %1171 = vmatpush1.bf16.msra.mxu0 %v848
      %1172 = vmatprep.subr.bf16.mxu0 %v853
      %1173 = vmatpush1.bf16.msra.mxu0 %v852
      %1174 = vmatprep.subr.bf16.mxu0 %v857
      %1175 = vmatpush1.bf16.msra.mxu0 %v856
      %1176 = vmatprep.subr.bf16.mxu0 %v861
      %1177 = vmatpush1.bf16.msra.mxu0 %v860
      %1178 = vmatprep.subr.bf16.mxu0 %v865
      %1179 = vmatpush1.bf16.msra.mxu0 %v864
      %1180 = vmatprep.subr.bf16.mxu0 %v869
      %1181 = vmatpush1.bf16.msra.mxu0 %v868
      %1182 = vmatprep.subr.bf16.mxu0 %v873
      %1183 = vmatpush1.bf16.msra.mxu0 %v872
      %1184 = vmatprep.subr.bf16.mxu0 %v877
      %1185 = vmatpush1.bf16.msra.mxu0 %v876
      %1186 = vmatprep.subr.bf16.mxu0 %v881
      %1187 = vmatpush1.bf16.msra.mxu0 %v880
      %1188 = vmatprep.mubr.bf16.mxu0 %v427
      %1189 = vmatmul.mubr.bf16.gmra.mrb[0].mxu0 %v426
      %v1190 = vpop.f32.mrb[0].mxu0
      %v1191 = vadd.f32 0.0, %v1190
      %v1192 = vpop.f32.mrb[0].mxu0
      %v1193 = vadd.f32 0.0, %v1192
      %v1194 = vpop.f32.mrb[0].mxu0
      %v1195 = vpop.f32.mrb[0].mxu0
      %1196 = vdwg.mxu0
      %1197 = vmatprep.subr.bf16.mxu0 %v885
      %1198 = vmatpush1.bf16.msra.mxu0 %v884
      %1199 = vmatprep.subr.bf16.mxu0 %v889
      %1200 = vmatpush1.bf16.msra.mxu0 %v888
      %1201 = vmatprep.subr.bf16.mxu0 %v893
      %1202 = vmatpush1.bf16.msra.mxu0 %v892
      %1203 = vmatprep.subr.bf16.mxu0 %v897
      %1204 = vmatpush1.bf16.msra.mxu0 %v896
      %1205 = vmatprep.subr.bf16.mxu0 %v901
      %1206 = vmatpush1.bf16.msra.mxu0 %v900
      %1207 = vmatprep.subr.bf16.mxu0 %v905
      %1208 = vmatpush1.bf16.msra.mxu0 %v904
      %1209 = vmatprep.subr.bf16.mxu0 %v909
      %1210 = vmatpush1.bf16.msra.mxu0 %v908
      %1211 = vmatprep.subr.bf16.mxu0 %v913
      %1212 = vmatpush1.bf16.msra.mxu0 %v912
      %1213 = vmatprep.subr.bf16.mxu0 %v917
      %1214 = vmatpush1.bf16.msra.mxu0 %v916
      %1215 = vmatprep.subr.bf16.mxu0 %v921
      %1216 = vmatpush1.bf16.msra.mxu0 %v920
      %1217 = vmatprep.subr.bf16.mxu0 %v925
      %1218 = vmatpush1.bf16.msra.mxu0 %v924
      %1219 = vmatprep.subr.bf16.mxu0 %v929
      %1220 = vmatpush1.bf16.msra.mxu0 %v928
      %1221 = vmatprep.subr.bf16.mxu0 %v933
      %1222 = vmatpush1.bf16.msra.mxu0 %v932
      %1223 = vmatprep.subr.bf16.mxu0 %v937
      %1224 = vmatpush1.bf16.msra.mxu0 %v936
      %1225 = vmatprep.subr.bf16.mxu0 %v941
      %1226 = vmatpush1.bf16.msra.mxu0 %v940
      %1227 = vmatprep.subr.bf16.mxu0 %v945
      %1228 = vmatpush1.bf16.msra.mxu0 %v944
      %1229 = vmatprep.mubr.bf16.mxu0 %v429
      %1230 = vmatmul.mubr.bf16.gmra.mrb[0].mxu0 %v428
      %v1231 = vpop.f32.mrb[0].mxu0
      %v1232 = vadd.f32 %v1191, %v1231
      %v1233 = vpop.f32.mrb[0].mxu0
      %v1234 = vadd.f32 %v1193, %v1233
      %v1235 = vpop.f32.mrb[0].mxu0
      %v1236 = vpop.f32.mrb[0].mxu0
      %1237 = vdwg.mxu0
      %v1238 = vadd.f32 %v286, %v1150
      %v1239 = vadd.f32 %v287, %v1152
      %v1240 = vadd.f32 %v288, %v1232
      %v1241 = vadd.f32 %v289, %v1234
      %1242 = vst [vmem:[#allocation2] sm:$0xff] %v1238
      %1243 = vst [vmem:[#allocation2 + $0x8] sm:$0xff] %v1239
      %1244 = vst [vmem:[#allocation2 + $0x10] sm:$0xff] %v1240
      %1245 = vst [vmem:[#allocation2 + $0x18] sm:$0xff] %v1241
      %p1246 = scmp.eq.s32.totalorder %s21, 1
      // Predicated region
      $region45: #{custom_clip_forward.1} parent=39 // pred_check
        %p1247 = pneg %p1246
      $region46: #{custom_clip_forward.1} parent=39 // pred_check_branch
        %1249 = sbr.rel (%p1247) target = $region48
      $region47: #{custom_clip_forward.1} parent=39 // pred_region
        %v1250 = vld [vmem:[#allocation2] sm:$0xff]
        %v1251 = vld [vmem:[#allocation2 + $0x8] sm:$0xff]
        %v1252 = vld [vmem:[#allocation2 + $0x10] sm:$0xff]
        %v1253 = vld [vmem:[#allocation2 + $0x18] sm:$0xff]
        %v1254 = vld [vmem:[%s4] ss:$2 sm:$0xf]
        %s1255 = scalar_lea.vmem %s4, 1
        %v1256 = vld [vmem:[%s1255] ss:$2 sm:$0xf]
        %v1257 = vpack.c.bf16 %v1250, %v1250
        %v1258 = vpack.c.bf16 %v1251, %v1251
        %v1259 = vpack.c.bf16 %v1252, %v1252
        %v1260 = vpack.c.bf16 %v1253, %v1253
        %v1261 = vld [vmem:[%s2] sm:$0xff]
        %v1262 = vld [vmem:[%s2 + $0x8] sm:$0xff]
        %v1263 = vld [vmem:[%s2 + $0x10] sm:$0xff]
        %v1264 = vld [vmem:[%s2 + $0x18] sm:$0xff]
        %v1265 = vld [vmem:[%s2 + $0x20] sm:$0xff]
        %v1266 = vld [vmem:[%s2 + $0x28] sm:$0xff]
        %v1267 = vld [vmem:[%s2 + $0x30] sm:$0xff]
        %v1268 = vld [vmem:[%s2 + $0x38] sm:$0xff]
        %v1269 = vld [vmem:[%s2 + $0x40] sm:$0xff]
        %v1270 = vld [vmem:[%s2 + $0x48] sm:$0xff]
        %v1271 = vld [vmem:[%s2 + $0x50] sm:$0xff]
        %v1272 = vld [vmem:[%s2 + $0x58] sm:$0xff]
        %v1273 = vld [vmem:[%s2 + $0x60] sm:$0xff]
        %v1274 = vld [vmem:[%s2 + $0x68] sm:$0xff]
        %v1275 = vld [vmem:[%s2 + $0x70] sm:$0xff]
        %v1276 = vld [vmem:[%s2 + $0x78] sm:$0xff]
        %v1277 = vld [vmem:[%s2 + $0x80] sm:$0xff]
        %v1278 = vld [vmem:[%s2 + $0x88] sm:$0xff]
        %v1279 = vld [vmem:[%s2 + $0x90] sm:$0xff]
        %v1280 = vld [vmem:[%s2 + $0x98] sm:$0xff]
        %v1281 = vld [vmem:[%s2 + $0xa0] sm:$0xff]
        %v1282 = vld [vmem:[%s2 + $0xa8] sm:$0xff]
        %v1283 = vld [vmem:[%s2 + $0xb0] sm:$0xff]
        %v1284 = vld [vmem:[%s2 + $0xb8] sm:$0xff]
        %v1285 = vld [vmem:[%s2 + $0xc0] sm:$0xff]
        %v1286 = vld [vmem:[%s2 + $0xc8] sm:$0xff]
        %v1287 = vld [vmem:[%s2 + $0xd0] sm:$0xff]
        %v1288 = vld [vmem:[%s2 + $0xd8] sm:$0xff]
        %v1289 = vld [vmem:[%s2 + $0xe0] sm:$0xff]
        %v1290 = vld [vmem:[%s2 + $0xe8] sm:$0xff]
        %v1291 = vld [vmem:[%s2 + $0xf0] sm:$0xff]
        %v1292 = vld [vmem:[%s2 + $0xf8] sm:$0xff]
        %v1293 = vld [vmem:[%s2 + $0x100] sm:$0xff]
        %v1294 = vld [vmem:[%s2 + $0x108] sm:$0xff]
        %v1295 = vld [vmem:[%s2 + $0x110] sm:$0xff]
        %v1296 = vld [vmem:[%s2 + $0x118] sm:$0xff]
        %v1297 = vld [vmem:[%s2 + $0x120] sm:$0xff]
        %v1298 = vld [vmem:[%s2 + $0x128] sm:$0xff]
        %v1299 = vld [vmem:[%s2 + $0x130] sm:$0xff]
        %v1300 = vld [vmem:[%s2 + $0x138] sm:$0xff]
        %v1301 = vld [vmem:[%s2 + $0x140] sm:$0xff]
        %v1302 = vld [vmem:[%s2 + $0x148] sm:$0xff]
        %v1303 = vld [vmem:[%s2 + $0x150] sm:$0xff]
        %v1304 = vld [vmem:[%s2 + $0x158] sm:$0xff]
        %v1305 = vld [vmem:[%s2 + $0x160] sm:$0xff]
        %v1306 = vld [vmem:[%s2 + $0x168] sm:$0xff]
        %v1307 = vld [vmem:[%s2 + $0x170] sm:$0xff]
        %v1308 = vld [vmem:[%s2 + $0x178] sm:$0xff]
        %v1309 = vld [vmem:[%s2 + $0x180] sm:$0xff]
        %v1310 = vld [vmem:[%s2 + $0x188] sm:$0xff]
        %v1311 = vld [vmem:[%s2 + $0x190] sm:$0xff]
        %v1312 = vld [vmem:[%s2 + $0x198] sm:$0xff]
        %v1313 = vld [vmem:[%s2 + $0x1a0] sm:$0xff]
        %v1314 = vld [vmem:[%s2 + $0x1a8] sm:$0xff]
        %v1315 = vld [vmem:[%s2 + $0x1b0] sm:$0xff]
        %v1316 = vld [vmem:[%s2 + $0x1b8] sm:$0xff]
        %v1317 = vld [vmem:[%s2 + $0x1c0] sm:$0xff]
        %v1318 = vld [vmem:[%s2 + $0x1c8] sm:$0xff]
        %v1319 = vld [vmem:[%s2 + $0x1d0] sm:$0xff]
        %v1320 = vld [vmem:[%s2 + $0x1d8] sm:$0xff]
        %v1321 = vld [vmem:[%s2 + $0x1e0] sm:$0xff]
        %v1322 = vld [vmem:[%s2 + $0x1e8] sm:$0xff]
        %v1323 = vld [vmem:[%s2 + $0x1f0] sm:$0xff]
        %v1324 = vld [vmem:[%s2 + $0x1f8] sm:$0xff]
        %v1325 = vld [vmem:[%s2 + $0x200] sm:$0xff]
        %v1326 = vld [vmem:[%s2 + $0x208] sm:$0xff]
        %v1327 = vld [vmem:[%s2 + $0x210] sm:$0xff]
        %v1328 = vld [vmem:[%s2 + $0x218] sm:$0xff]
        %v1329 = vld [vmem:[%s2 + $0x220] sm:$0xff]
        %v1330 = vld [vmem:[%s2 + $0x228] sm:$0xff]
        %v1331 = vld [vmem:[%s2 + $0x230] sm:$0xff]
        %v1332 = vld [vmem:[%s2 + $0x238] sm:$0xff]
        %v1333 = vld [vmem:[%s2 + $0x240] sm:$0xff]
        %v1334 = vld [vmem:[%s2 + $0x248] sm:$0xff]
        %v1335 = vld [vmem:[%s2 + $0x250] sm:$0xff]
        %v1336 = vld [vmem:[%s2 + $0x258] sm:$0xff]
        %v1337 = vld [vmem:[%s2 + $0x260] sm:$0xff]
        %v1338 = vld [vmem:[%s2 + $0x268] sm:$0xff]
        %v1339 = vld [vmem:[%s2 + $0x270] sm:$0xff]
        %v1340 = vld [vmem:[%s2 + $0x278] sm:$0xff]
        %v1341 = vld [vmem:[%s2 + $0x280] sm:$0xff]
        %v1342 = vld [vmem:[%s2 + $0x288] sm:$0xff]
        %v1343 = vld [vmem:[%s2 + $0x290] sm:$0xff]
        %v1344 = vld [vmem:[%s2 + $0x298] sm:$0xff]
        %v1345 = vld [vmem:[%s2 + $0x2a0] sm:$0xff]
        %v1346 = vld [vmem:[%s2 + $0x2a8] sm:$0xff]
        %v1347 = vld [vmem:[%s2 + $0x2b0] sm:$0xff]
        %v1348 = vld [vmem:[%s2 + $0x2b8] sm:$0xff]
        %v1349 = vld [vmem:[%s2 + $0x2c0] sm:$0xff]
        %v1350 = vld [vmem:[%s2 + $0x2c8] sm:$0xff]
        %v1351 = vld [vmem:[%s2 + $0x2d0] sm:$0xff]
        %v1352 = vld [vmem:[%s2 + $0x2d8] sm:$0xff]
        %v1353 = vld [vmem:[%s2 + $0x2e0] sm:$0xff]
        %v1354 = vld [vmem:[%s2 + $0x2e8] sm:$0xff]
        %v1355 = vld [vmem:[%s2 + $0x2f0] sm:$0xff]
        %v1356 = vld [vmem:[%s2 + $0x2f8] sm:$0xff]
        %v1357 = vld [vmem:[%s2 + $0x300] sm:$0xff]
        %v1358 = vld [vmem:[%s2 + $0x308] sm:$0xff]
        %v1359 = vld [vmem:[%s2 + $0x310] sm:$0xff]
        %v1360 = vld [vmem:[%s2 + $0x318] sm:$0xff]
        %v1361 = vld [vmem:[%s2 + $0x320] sm:$0xff]
        %v1362 = vld [vmem:[%s2 + $0x328] sm:$0xff]
        %v1363 = vld [vmem:[%s2 + $0x330] sm:$0xff]
        %v1364 = vld [vmem:[%s2 + $0x338] sm:$0xff]
        %v1365 = vld [vmem:[%s2 + $0x340] sm:$0xff]
        %v1366 = vld [vmem:[%s2 + $0x348] sm:$0xff]
        %v1367 = vld [vmem:[%s2 + $0x350] sm:$0xff]
        %v1368 = vld [vmem:[%s2 + $0x358] sm:$0xff]
        %v1369 = vld [vmem:[%s2 + $0x360] sm:$0xff]
        %v1370 = vld [vmem:[%s2 + $0x368] sm:$0xff]
        %v1371 = vld [vmem:[%s2 + $0x370] sm:$0xff]
        %v1372 = vld [vmem:[%s2 + $0x378] sm:$0xff]
        %v1373 = vld [vmem:[%s2 + $0x380] sm:$0xff]
        %v1374 = vld [vmem:[%s2 + $0x388] sm:$0xff]
        %v1375 = vld [vmem:[%s2 + $0x390] sm:$0xff]
        %v1376 = vld [vmem:[%s2 + $0x398] sm:$0xff]
        %v1377 = vld [vmem:[%s2 + $0x3a0] sm:$0xff]
        %v1378 = vld [vmem:[%s2 + $0x3a8] sm:$0xff]
        %v1379 = vld [vmem:[%s2 + $0x3b0] sm:$0xff]
        %v1380 = vld [vmem:[%s2 + $0x3b8] sm:$0xff]
        %v1381 = vld [vmem:[%s2 + $0x3c0] sm:$0xff]
        %v1382 = vld [vmem:[%s2 + $0x3c8] sm:$0xff]
        %v1383 = vld [vmem:[%s2 + $0x3d0] sm:$0xff]
        %v1384 = vld [vmem:[%s2 + $0x3d8] sm:$0xff]
        %v1385 = vld [vmem:[%s2 + $0x3e0] sm:$0xff]
        %v1386 = vld [vmem:[%s2 + $0x3e8] sm:$0xff]
        %v1387 = vld [vmem:[%s2 + $0x3f0] sm:$0xff]
        %v1388 = vld [vmem:[%s2 + $0x3f8] sm:$0xff]
        %v1390 = vlaneseq
        %v1391 = vshrl.u32 %v1390, 7
        %v1392 = vsub.s32 0, %v1391
        %v1393 = vrot.slane %v1254, %v1392
        %v1394 = vlaneseq
        %v1395 = vshrl.u32 %v1394, 7
        %v1396 = vsub.s32 1, %v1395
        %v1397 = vrot.slane %v1254, %v1396
        %v1398 = vlaneseq
        %v1399 = vshrl.u32 %v1398, 7
        %v1400 = vsub.s32 2, %v1399
        %v1401 = vrot.slane %v1254, %v1400
        %v1402 = vlaneseq
        %v1403 = vshrl.u32 %v1402, 7
        %v1404 = vsub.s32 3, %v1403
        %v1405 = vrot.slane %v1254, %v1404
        %v1538 = vunpack.c.l.b16 %v1261
        %v1539 = vunpack.c.h.b16 %v1261
        %v1540 = vunpack.c.l.b16 %v1262
        %v1541 = vunpack.c.h.b16 %v1262
        %v1542 = vunpack.c.l.b16 %v1263
        %v1543 = vunpack.c.h.b16 %v1263
        %v1544 = vunpack.c.l.b16 %v1264
        %v1545 = vunpack.c.h.b16 %v1264
        %v1546 = vunpack.c.l.b16 %v1265
        %v1547 = vunpack.c.h.b16 %v1265
        %v1548 = vunpack.c.l.b16 %v1266
        %v1549 = vunpack.c.h.b16 %v1266
        %v1550 = vunpack.c.l.b16 %v1267
        %v1551 = vunpack.c.h.b16 %v1267
        %v1552 = vunpack.c.l.b16 %v1268
        %v1553 = vunpack.c.h.b16 %v1268
        %v1554 = vunpack.c.l.b16 %v1269
        %v1555 = vunpack.c.h.b16 %v1269
        %v1556 = vunpack.c.l.b16 %v1270
        %v1557 = vunpack.c.h.b16 %v1270
        %v1558 = vunpack.c.l.b16 %v1271
        %v1559 = vunpack.c.h.b16 %v1271
        %v1560 = vunpack.c.l.b16 %v1272
        %v1561 = vunpack.c.h.b16 %v1272
        %v1562 = vunpack.c.l.b16 %v1273
        %v1563 = vunpack.c.h.b16 %v1273
        %v1564 = vunpack.c.l.b16 %v1274
        %v1565 = vunpack.c.h.b16 %v1274
        %v1566 = vunpack.c.l.b16 %v1275
        %v1567 = vunpack.c.h.b16 %v1275
        %v1568 = vunpack.c.l.b16 %v1276
        %v1569 = vunpack.c.h.b16 %v1276
        %v1570 = vunpack.c.l.b16 %v1277
        %v1571 = vunpack.c.h.b16 %v1277
        %v1572 = vunpack.c.l.b16 %v1278
        %v1573 = vunpack.c.h.b16 %v1278
        %v1574 = vunpack.c.l.b16 %v1279
        %v1575 = vunpack.c.h.b16 %v1279
        %v1576 = vunpack.c.l.b16 %v1280
        %v1577 = vunpack.c.h.b16 %v1280
        %v1578 = vunpack.c.l.b16 %v1281
        %v1579 = vunpack.c.h.b16 %v1281
        %v1580 = vunpack.c.l.b16 %v1282
        %v1581 = vunpack.c.h.b16 %v1282
        %v1582 = vunpack.c.l.b16 %v1283
        %v1583 = vunpack.c.h.b16 %v1283
        %v1584 = vunpack.c.l.b16 %v1284
        %v1585 = vunpack.c.h.b16 %v1284
        %v1586 = vunpack.c.l.b16 %v1285
        %v1587 = vunpack.c.h.b16 %v1285
        %v1588 = vunpack.c.l.b16 %v1286
        %v1589 = vunpack.c.h.b16 %v1286
        %v1590 = vunpack.c.l.b16 %v1287
        %v1591 = vunpack.c.h.b16 %v1287
        %v1592 = vunpack.c.l.b16 %v1288
        %v1593 = vunpack.c.h.b16 %v1288
        %v1594 = vunpack.c.l.b16 %v1289
        %v1595 = vunpack.c.h.b16 %v1289
        %v1596 = vunpack.c.l.b16 %v1290
        %v1597 = vunpack.c.h.b16 %v1290
        %v1598 = vunpack.c.l.b16 %v1291
        %v1599 = vunpack.c.h.b16 %v1291
        %v1600 = vunpack.c.l.b16 %v1292
        %v1601 = vunpack.c.h.b16 %v1292
        %v1602 = vunpack.c.l.b16 %v1293
        %v1603 = vunpack.c.h.b16 %v1293
        %v1604 = vunpack.c.l.b16 %v1294
        %v1605 = vunpack.c.h.b16 %v1294
        %v1606 = vunpack.c.l.b16 %v1295
        %v1607 = vunpack.c.h.b16 %v1295
        %v1608 = vunpack.c.l.b16 %v1296
        %v1609 = vunpack.c.h.b16 %v1296
        %v1610 = vunpack.c.l.b16 %v1297
        %v1611 = vunpack.c.h.b16 %v1297
        %v1612 = vunpack.c.l.b16 %v1298
        %v1613 = vunpack.c.h.b16 %v1298
        %v1614 = vunpack.c.l.b16 %v1299
        %v1615 = vunpack.c.h.b16 %v1299
        %v1616 = vunpack.c.l.b16 %v1300
        %v1617 = vunpack.c.h.b16 %v1300
        %v1618 = vunpack.c.l.b16 %v1301
        %v1619 = vunpack.c.h.b16 %v1301
        %v1620 = vunpack.c.l.b16 %v1302
        %v1621 = vunpack.c.h.b16 %v1302
        %v1622 = vunpack.c.l.b16 %v1303
        %v1623 = vunpack.c.h.b16 %v1303
        %v1624 = vunpack.c.l.b16 %v1304
        %v1625 = vunpack.c.h.b16 %v1304
        %v1626 = vunpack.c.l.b16 %v1305
        %v1627 = vunpack.c.h.b16 %v1305
        %v1628 = vunpack.c.l.b16 %v1306
        %v1629 = vunpack.c.h.b16 %v1306
        %v1630 = vunpack.c.l.b16 %v1307
        %v1631 = vunpack.c.h.b16 %v1307
        %v1632 = vunpack.c.l.b16 %v1308
        %v1633 = vunpack.c.h.b16 %v1308
        %v1634 = vunpack.c.l.b16 %v1309
        %v1635 = vunpack.c.h.b16 %v1309
        %v1636 = vunpack.c.l.b16 %v1310
        %v1637 = vunpack.c.h.b16 %v1310
        %v1638 = vunpack.c.l.b16 %v1311
        %v1639 = vunpack.c.h.b16 %v1311
        %v1640 = vunpack.c.l.b16 %v1312
        %v1641 = vunpack.c.h.b16 %v1312
        %v1642 = vunpack.c.l.b16 %v1313
        %v1643 = vunpack.c.h.b16 %v1313
        %v1644 = vunpack.c.l.b16 %v1314
        %v1645 = vunpack.c.h.b16 %v1314
        %v1646 = vunpack.c.l.b16 %v1315
        %v1647 = vunpack.c.h.b16 %v1315
        %v1648 = vunpack.c.l.b16 %v1316
        %v1649 = vunpack.c.h.b16 %v1316
        %v1650 = vunpack.c.l.b16 %v1317
        %v1651 = vunpack.c.h.b16 %v1317
        %v1652 = vunpack.c.l.b16 %v1318
        %v1653 = vunpack.c.h.b16 %v1318
        %v1654 = vunpack.c.l.b16 %v1319
        %v1655 = vunpack.c.h.b16 %v1319
        %v1656 = vunpack.c.l.b16 %v1320
        %v1657 = vunpack.c.h.b16 %v1320
        %v1658 = vunpack.c.l.b16 %v1321
        %v1659 = vunpack.c.h.b16 %v1321
        %v1660 = vunpack.c.l.b16 %v1322
        %v1661 = vunpack.c.h.b16 %v1322
        %v1662 = vunpack.c.l.b16 %v1323
        %v1663 = vunpack.c.h.b16 %v1323
        %v1664 = vunpack.c.l.b16 %v1324
        %v1665 = vunpack.c.h.b16 %v1324
        %v1666 = vunpack.c.l.b16 %v1325
        %v1667 = vunpack.c.h.b16 %v1325
        %v1668 = vunpack.c.l.b16 %v1326
        %v1669 = vunpack.c.h.b16 %v1326
        %v1670 = vunpack.c.l.b16 %v1327
        %v1671 = vunpack.c.h.b16 %v1327
        %v1672 = vunpack.c.l.b16 %v1328
        %v1673 = vunpack.c.h.b16 %v1328
        %v1674 = vunpack.c.l.b16 %v1329
        %v1675 = vunpack.c.h.b16 %v1329
        %v1676 = vunpack.c.l.b16 %v1330
        %v1677 = vunpack.c.h.b16 %v1330
        %v1678 = vunpack.c.l.b16 %v1331
        %v1679 = vunpack.c.h.b16 %v1331
        %v1680 = vunpack.c.l.b16 %v1332
        %v1681 = vunpack.c.h.b16 %v1332
        %v1682 = vunpack.c.l.b16 %v1333
        %v1683 = vunpack.c.h.b16 %v1333
        %v1684 = vunpack.c.l.b16 %v1334
        %v1685 = vunpack.c.h.b16 %v1334
        %v1686 = vunpack.c.l.b16 %v1335
        %v1687 = vunpack.c.h.b16 %v1335
        %v1688 = vunpack.c.l.b16 %v1336
        %v1689 = vunpack.c.h.b16 %v1336
        %v1690 = vunpack.c.l.b16 %v1337
        %v1691 = vunpack.c.h.b16 %v1337
        %v1692 = vunpack.c.l.b16 %v1338
        %v1693 = vunpack.c.h.b16 %v1338
        %v1694 = vunpack.c.l.b16 %v1339
        %v1695 = vunpack.c.h.b16 %v1339
        %v1696 = vunpack.c.l.b16 %v1340
        %v1697 = vunpack.c.h.b16 %v1340
        %v1698 = vunpack.c.l.b16 %v1341
        %v1699 = vunpack.c.h.b16 %v1341
        %v1700 = vunpack.c.l.b16 %v1342
        %v1701 = vunpack.c.h.b16 %v1342
        %v1702 = vunpack.c.l.b16 %v1343
        %v1703 = vunpack.c.h.b16 %v1343
        %v1704 = vunpack.c.l.b16 %v1344
        %v1705 = vunpack.c.h.b16 %v1344
        %v1706 = vunpack.c.l.b16 %v1345
        %v1707 = vunpack.c.h.b16 %v1345
        %v1708 = vunpack.c.l.b16 %v1346
        %v1709 = vunpack.c.h.b16 %v1346
        %v1710 = vunpack.c.l.b16 %v1347
        %v1711 = vunpack.c.h.b16 %v1347
        %v1712 = vunpack.c.l.b16 %v1348
        %v1713 = vunpack.c.h.b16 %v1348
        %v1714 = vunpack.c.l.b16 %v1349
        %v1715 = vunpack.c.h.b16 %v1349
        %v1716 = vunpack.c.l.b16 %v1350
        %v1717 = vunpack.c.h.b16 %v1350
        %v1718 = vunpack.c.l.b16 %v1351
        %v1719 = vunpack.c.h.b16 %v1351
        %v1720 = vunpack.c.l.b16 %v1352
        %v1721 = vunpack.c.h.b16 %v1352
        %v1722 = vunpack.c.l.b16 %v1353
        %v1723 = vunpack.c.h.b16 %v1353
        %v1724 = vunpack.c.l.b16 %v1354
        %v1725 = vunpack.c.h.b16 %v1354
        %v1726 = vunpack.c.l.b16 %v1355
        %v1727 = vunpack.c.h.b16 %v1355
        %v1728 = vunpack.c.l.b16 %v1356
        %v1729 = vunpack.c.h.b16 %v1356
        %v1730 = vunpack.c.l.b16 %v1357
        %v1731 = vunpack.c.h.b16 %v1357
        %v1732 = vunpack.c.l.b16 %v1358
        %v1733 = vunpack.c.h.b16 %v1358
        %v1734 = vunpack.c.l.b16 %v1359
        %v1735 = vunpack.c.h.b16 %v1359
        %v1736 = vunpack.c.l.b16 %v1360
        %v1737 = vunpack.c.h.b16 %v1360
        %v1738 = vunpack.c.l.b16 %v1361
        %v1739 = vunpack.c.h.b16 %v1361
        %v1740 = vunpack.c.l.b16 %v1362
        %v1741 = vunpack.c.h.b16 %v1362
        %v1742 = vunpack.c.l.b16 %v1363
        %v1743 = vunpack.c.h.b16 %v1363
        %v1744 = vunpack.c.l.b16 %v1364
        %v1745 = vunpack.c.h.b16 %v1364
        %v1746 = vunpack.c.l.b16 %v1365
        %v1747 = vunpack.c.h.b16 %v1365
        %v1748 = vunpack.c.l.b16 %v1366
        %v1749 = vunpack.c.h.b16 %v1366
        %v1750 = vunpack.c.l.b16 %v1367
        %v1751 = vunpack.c.h.b16 %v1367
        %v1752 = vunpack.c.l.b16 %v1368
        %v1753 = vunpack.c.h.b16 %v1368
        %v1754 = vunpack.c.l.b16 %v1369
        %v1755 = vunpack.c.h.b16 %v1369
        %v1756 = vunpack.c.l.b16 %v1370
        %v1757 = vunpack.c.h.b16 %v1370
        %v1758 = vunpack.c.l.b16 %v1371
        %v1759 = vunpack.c.h.b16 %v1371
        %v1760 = vunpack.c.l.b16 %v1372
        %v1761 = vunpack.c.h.b16 %v1372
        %v1762 = vunpack.c.l.b16 %v1373
        %v1763 = vunpack.c.h.b16 %v1373
        %v1764 = vunpack.c.l.b16 %v1374
        %v1765 = vunpack.c.h.b16 %v1374
        %v1766 = vunpack.c.l.b16 %v1375
        %v1767 = vunpack.c.h.b16 %v1375
        %v1768 = vunpack.c.l.b16 %v1376
        %v1769 = vunpack.c.h.b16 %v1376
        %v1770 = vunpack.c.l.b16 %v1377
        %v1771 = vunpack.c.h.b16 %v1377
        %v1772 = vunpack.c.l.b16 %v1378
        %v1773 = vunpack.c.h.b16 %v1378
        %v1774 = vunpack.c.l.b16 %v1379
        %v1775 = vunpack.c.h.b16 %v1379
        %v1776 = vunpack.c.l.b16 %v1380
        %v1777 = vunpack.c.h.b16 %v1380
        %v1778 = vunpack.c.l.b16 %v1381
        %v1779 = vunpack.c.h.b16 %v1381
        %v1780 = vunpack.c.l.b16 %v1382
        %v1781 = vunpack.c.h.b16 %v1382
        %v1782 = vunpack.c.l.b16 %v1383
        %v1783 = vunpack.c.h.b16 %v1383
        %v1784 = vunpack.c.l.b16 %v1384
        %v1785 = vunpack.c.h.b16 %v1384
        %v1786 = vunpack.c.l.b16 %v1385
        %v1787 = vunpack.c.h.b16 %v1385
        %v1788 = vunpack.c.l.b16 %v1386
        %v1789 = vunpack.c.h.b16 %v1386
        %v1790 = vunpack.c.l.b16 %v1387
        %v1791 = vunpack.c.h.b16 %v1387
        %v1792 = vunpack.c.l.b16 %v1388
        %v1793 = vunpack.c.h.b16 %v1388
        %v1794 = vpack.c.b16 %v1542, %v1538
        %v1795 = vpack.c.b16 %v1543, %v1539
        %v1796 = vpack.c.b16 %v1544, %v1540
        %v1797 = vpack.c.b16 %v1545, %v1541
        %v1798 = vpack.c.b16 %v1550, %v1546
        %v1799 = vpack.c.b16 %v1551, %v1547
        %v1800 = vpack.c.b16 %v1552, %v1548
        %v1801 = vpack.c.b16 %v1553, %v1549
        %v1802 = vpack.c.b16 %v1558, %v1554
        %v1803 = vpack.c.b16 %v1559, %v1555
        %v1804 = vpack.c.b16 %v1560, %v1556
        %v1805 = vpack.c.b16 %v1561, %v1557
        %v1806 = vpack.c.b16 %v1566, %v1562
        %v1807 = vpack.c.b16 %v1567, %v1563
        %v1808 = vpack.c.b16 %v1568, %v1564
        %v1809 = vpack.c.b16 %v1569, %v1565
        %v1810 = vpack.c.b16 %v1574, %v1570
        %v1811 = vpack.c.b16 %v1575, %v1571
        %v1812 = vpack.c.b16 %v1576, %v1572
        %v1813 = vpack.c.b16 %v1577, %v1573
        %v1814 = vpack.c.b16 %v1582, %v1578
        %v1815 = vpack.c.b16 %v1583, %v1579
        %v1816 = vpack.c.b16 %v1584, %v1580
        %v1817 = vpack.c.b16 %v1585, %v1581
        %v1818 = vpack.c.b16 %v1590, %v1586
        %v1819 = vpack.c.b16 %v1591, %v1587
        %v1820 = vpack.c.b16 %v1592, %v1588
        %v1821 = vpack.c.b16 %v1593, %v1589
        %v1822 = vpack.c.b16 %v1598, %v1594
        %v1823 = vpack.c.b16 %v1599, %v1595
        %v1824 = vpack.c.b16 %v1600, %v1596
        %v1825 = vpack.c.b16 %v1601, %v1597
        %v1826 = vpack.c.b16 %v1606, %v1602
        %v1827 = vpack.c.b16 %v1607, %v1603
        %v1828 = vpack.c.b16 %v1608, %v1604
        %v1829 = vpack.c.b16 %v1609, %v1605
        %v1830 = vpack.c.b16 %v1614, %v1610
        %v1831 = vpack.c.b16 %v1615, %v1611
        %v1832 = vpack.c.b16 %v1616, %v1612
        %v1833 = vpack.c.b16 %v1617, %v1613
        %v1834 = vpack.c.b16 %v1622, %v1618
        %v1835 = vpack.c.b16 %v1623, %v1619
        %v1836 = vpack.c.b16 %v1624, %v1620
        %v1837 = vpack.c.b16 %v1625, %v1621
        %v1838 = vpack.c.b16 %v1630, %v1626
        %v1839 = vpack.c.b16 %v1631, %v1627
        %v1840 = vpack.c.b16 %v1632, %v1628
        %v1841 = vpack.c.b16 %v1633, %v1629
        %v1842 = vpack.c.b16 %v1638, %v1634
        %v1843 = vpack.c.b16 %v1639, %v1635
        %v1844 = vpack.c.b16 %v1640, %v1636
        %v1845 = vpack.c.b16 %v1641, %v1637
        %v1846 = vpack.c.b16 %v1646, %v1642
        %v1847 = vpack.c.b16 %v1647, %v1643
        %v1848 = vpack.c.b16 %v1648, %v1644
        %v1849 = vpack.c.b16 %v1649, %v1645
        %v1850 = vpack.c.b16 %v1654, %v1650
        %v1851 = vpack.c.b16 %v1655, %v1651
        %v1852 = vpack.c.b16 %v1656, %v1652
        %v1853 = vpack.c.b16 %v1657, %v1653
        %v1854 = vpack.c.b16 %v1662, %v1658
        %v1855 = vpack.c.b16 %v1663, %v1659
        %v1856 = vpack.c.b16 %v1664, %v1660
        %v1857 = vpack.c.b16 %v1665, %v1661
        %v1858 = vpack.c.b16 %v1670, %v1666
        %v1859 = vpack.c.b16 %v1671, %v1667
        %v1860 = vpack.c.b16 %v1672, %v1668
        %v1861 = vpack.c.b16 %v1673, %v1669
        %v1862 = vpack.c.b16 %v1678, %v1674
        %v1863 = vpack.c.b16 %v1679, %v1675
        %v1864 = vpack.c.b16 %v1680, %v1676
        %v1865 = vpack.c.b16 %v1681, %v1677
        %v1866 = vpack.c.b16 %v1686, %v1682
        %v1867 = vpack.c.b16 %v1687, %v1683
        %v1868 = vpack.c.b16 %v1688, %v1684
        %v1869 = vpack.c.b16 %v1689, %v1685
        %v1870 = vpack.c.b16 %v1694, %v1690
        %v1871 = vpack.c.b16 %v1695, %v1691
        %v1872 = vpack.c.b16 %v1696, %v1692
        %v1873 = vpack.c.b16 %v1697, %v1693
        %v1874 = vpack.c.b16 %v1702, %v1698
        %v1875 = vpack.c.b16 %v1703, %v1699
        %v1876 = vpack.c.b16 %v1704, %v1700
        %v1877 = vpack.c.b16 %v1705, %v1701
        %v1878 = vpack.c.b16 %v1710, %v1706
        %v1879 = vpack.c.b16 %v1711, %v1707
        %v1880 = vpack.c.b16 %v1712, %v1708
        %v1881 = vpack.c.b16 %v1713, %v1709
        %v1882 = vpack.c.b16 %v1718, %v1714
        %v1883 = vpack.c.b16 %v1719, %v1715
        %v1884 = vpack.c.b16 %v1720, %v1716
        %v1885 = vpack.c.b16 %v1721, %v1717
        %v1886 = vpack.c.b16 %v1726, %v1722
        %v1887 = vpack.c.b16 %v1727, %v1723
        %v1888 = vpack.c.b16 %v1728, %v1724
        %v1889 = vpack.c.b16 %v1729, %v1725
        %v1890 = vpack.c.b16 %v1734, %v1730
        %v1891 = vpack.c.b16 %v1735, %v1731
        %v1892 = vpack.c.b16 %v1736, %v1732
        %v1893 = vpack.c.b16 %v1737, %v1733
        %v1894 = vpack.c.b16 %v1742, %v1738
        %v1895 = vpack.c.b16 %v1743, %v1739
        %v1896 = vpack.c.b16 %v1744, %v1740
        %v1897 = vpack.c.b16 %v1745, %v1741
        %v1898 = vpack.c.b16 %v1750, %v1746
        %v1899 = vpack.c.b16 %v1751, %v1747
        %v1900 = vpack.c.b16 %v1752, %v1748
        %v1901 = vpack.c.b16 %v1753, %v1749
        %v1902 = vpack.c.b16 %v1758, %v1754
        %v1903 = vpack.c.b16 %v1759, %v1755
        %v1904 = vpack.c.b16 %v1760, %v1756
        %v1905 = vpack.c.b16 %v1761, %v1757
        %v1906 = vpack.c.b16 %v1766, %v1762
        %v1907 = vpack.c.b16 %v1767, %v1763
        %v1908 = vpack.c.b16 %v1768, %v1764
        %v1909 = vpack.c.b16 %v1769, %v1765
        %v1910 = vpack.c.b16 %v1774, %v1770
        %v1911 = vpack.c.b16 %v1775, %v1771
        %v1912 = vpack.c.b16 %v1776, %v1772
        %v1913 = vpack.c.b16 %v1777, %v1773
        %v1914 = vpack.c.b16 %v1782, %v1778
        %v1915 = vpack.c.b16 %v1783, %v1779
        %v1916 = vpack.c.b16 %v1784, %v1780
        %v1917 = vpack.c.b16 %v1785, %v1781
        %v1918 = vpack.c.b16 %v1790, %v1786
        %v1919 = vpack.c.b16 %v1791, %v1787
        %v1920 = vpack.c.b16 %v1792, %v1788
        %v1921 = vpack.c.b16 %v1793, %v1789
        %2050 = vmatprep.subr.bf16.mxu0 %v1795
        %2051 = vmatpush1.bf16.msra.mxu0 %v1794
        %2052 = vmatprep.subr.bf16.mxu0 %v1799
        %2053 = vmatpush1.bf16.msra.mxu0 %v1798
        %2054 = vmatprep.subr.bf16.mxu0 %v1803
        %2055 = vmatpush1.bf16.msra.mxu0 %v1802
        %2056 = vmatprep.subr.bf16.mxu0 %v1807
        %2057 = vmatpush1.bf16.msra.mxu0 %v1806
        %2058 = vmatprep.subr.bf16.mxu0 %v1811
        %2059 = vmatpush1.bf16.msra.mxu0 %v1810
        %2060 = vmatprep.subr.bf16.mxu0 %v1815
        %2061 = vmatpush1.bf16.msra.mxu0 %v1814
        %2062 = vmatprep.subr.bf16.mxu0 %v1819
        %2063 = vmatpush1.bf16.msra.mxu0 %v1818
        %2064 = vmatprep.subr.bf16.mxu0 %v1823
        %2065 = vmatpush1.bf16.msra.mxu0 %v1822
        %2066 = vmatprep.subr.bf16.mxu0 %v1827
        %2067 = vmatpush1.bf16.msra.mxu0 %v1826
        %2068 = vmatprep.subr.bf16.mxu0 %v1831
        %2069 = vmatpush1.bf16.msra.mxu0 %v1830
        %2070 = vmatprep.subr.bf16.mxu0 %v1835
        %2071 = vmatpush1.bf16.msra.mxu0 %v1834
        %2072 = vmatprep.subr.bf16.mxu0 %v1839
        %2073 = vmatpush1.bf16.msra.mxu0 %v1838
        %2074 = vmatprep.subr.bf16.mxu0 %v1843
        %2075 = vmatpush1.bf16.msra.mxu0 %v1842
        %2076 = vmatprep.subr.bf16.mxu0 %v1847
        %2077 = vmatpush1.bf16.msra.mxu0 %v1846
        %2078 = vmatprep.subr.bf16.mxu0 %v1851
        %2079 = vmatpush1.bf16.msra.mxu0 %v1850
        %2080 = vmatprep.subr.bf16.mxu0 %v1855
        %2081 = vmatpush1.bf16.msra.mxu0 %v1854
        %2082 = vmatprep.mubr.bf16.mxu0 %v1258
        %2083 = vmatmul.mubr.bf16.gmra.mrb[0].mxu0 %v1257
        %v2084 = vpop.f32.mrb[0].mxu0
        %v2085 = vadd.f32 %v1393, %v2084
        %v2086 = vpop.f32.mrb[0].mxu0
        %v2087 = vadd.f32 %v1397, %v2086
        %v2088 = vpop.f32.mrb[0].mxu0
        %v2089 = vpop.f32.mrb[0].mxu0
        %2090 = vdwg.mxu0
        %2091 = vmatprep.subr.bf16.mxu0 %v1859
        %2092 = vmatpush1.bf16.msra.mxu0 %v1858
        %2093 = vmatprep.subr.bf16.mxu0 %v1863
        %2094 = vmatpush1.bf16.msra.mxu0 %v1862
        %2095 = vmatprep.subr.bf16.mxu0 %v1867
        %2096 = vmatpush1.bf16.msra.mxu0 %v1866
        %2097 = vmatprep.subr.bf16.mxu0 %v1871
        %2098 = vmatpush1.bf16.msra.mxu0 %v1870
        %2099 = vmatprep.subr.bf16.mxu0 %v1875
        %2100 = vmatpush1.bf16.msra.mxu0 %v1874
        %2101 = vmatprep.subr.bf16.mxu0 %v1879
        %2102 = vmatpush1.bf16.msra.mxu0 %v1878
        %2103 = vmatprep.subr.bf16.mxu0 %v1883
        %2104 = vmatpush1.bf16.msra.mxu0 %v1882
        %2105 = vmatprep.subr.bf16.mxu0 %v1887
        %2106 = vmatpush1.bf16.msra.mxu0 %v1886
        %2107 = vmatprep.subr.bf16.mxu0 %v1891
        %2108 = vmatpush1.bf16.msra.mxu0 %v1890
        %2109 = vmatprep.subr.bf16.mxu0 %v1895
        %2110 = vmatpush1.bf16.msra.mxu0 %v1894
        %2111 = vmatprep.subr.bf16.mxu0 %v1899
        %2112 = vmatpush1.bf16.msra.mxu0 %v1898
        %2113 = vmatprep.subr.bf16.mxu0 %v1903
        %2114 = vmatpush1.bf16.msra.mxu0 %v1902
        %2115 = vmatprep.subr.bf16.mxu0 %v1907
        %2116 = vmatpush1.bf16.msra.mxu0 %v1906
        %2117 = vmatprep.subr.bf16.mxu0 %v1911
        %2118 = vmatpush1.bf16.msra.mxu0 %v1910
        %2119 = vmatprep.subr.bf16.mxu0 %v1915
        %2120 = vmatpush1.bf16.msra.mxu0 %v1914
        %2121 = vmatprep.subr.bf16.mxu0 %v1919
        %2122 = vmatpush1.bf16.msra.mxu0 %v1918
        %2123 = vmatprep.mubr.bf16.mxu0 %v1260
        %2124 = vmatmul.mubr.bf16.gmra.mrb[0].mxu0 %v1259
        %v2125 = vpop.f32.mrb[0].mxu0
        %v2126 = vadd.f32 %v2085, %v2125
        %v2127 = vpop.f32.mrb[0].mxu0
        %v2128 = vadd.f32 %v2087, %v2127
        %v2129 = vpop.f32.mrb[0].mxu0
        %v2130 = vpop.f32.mrb[0].mxu0
        %2131 = vdwg.mxu0
        %2132 = vmatprep.subr.bf16.mxu0 %v1797
        %2133 = vmatpush1.bf16.msra.mxu0 %v1796
        %2134 = vmatprep.subr.bf16.mxu0 %v1801
        %2135 = vmatpush1.bf16.msra.mxu0 %v1800
        %2136 = vmatprep.subr.bf16.mxu0 %v1805
        %2137 = vmatpush1.bf16.msra.mxu0 %v1804
        %2138 = vmatprep.subr.bf16.mxu0 %v1809
        %2139 = vmatpush1.bf16.msra.mxu0 %v1808
        %2140 = vmatprep.subr.bf16.mxu0 %v1813
        %2141 = vmatpush1.bf16.msra.mxu0 %v1812
        %2142 = vmatprep.subr.bf16.mxu0 %v1817
        %2143 = vmatpush1.bf16.msra.mxu0 %v1816
        %2144 = vmatprep.subr.bf16.mxu0 %v1821
        %2145 = vmatpush1.bf16.msra.mxu0 %v1820
        %2146 = vmatprep.subr.bf16.mxu0 %v1825
        %2147 = vmatpush1.bf16.msra.mxu0 %v1824
        %2148 = vmatprep.subr.bf16.mxu0 %v1829
        %2149 = vmatpush1.bf16.msra.mxu0 %v1828
        %2150 = vmatprep.subr.bf16.mxu0 %v1833
        %2151 = vmatpush1.bf16.msra.mxu0 %v1832
        %2152 = vmatprep.subr.bf16.mxu0 %v1837
        %2153 = vmatpush1.bf16.msra.mxu0 %v1836
        %2154 = vmatprep.subr.bf16.mxu0 %v1841
        %2155 = vmatpush1.bf16.msra.mxu0 %v1840
        %2156 = vmatprep.subr.bf16.mxu0 %v1845
        %2157 = vmatpush1.bf16.msra.mxu0 %v1844
        %2158 = vmatprep.subr.bf16.mxu0 %v1849
        %2159 = vmatpush1.bf16.msra.mxu0 %v1848
        %2160 = vmatprep.subr.bf16.mxu0 %v1853
        %2161 = vmatpush1.bf16.msra.mxu0 %v1852
        %2162 = vmatprep.subr.bf16.mxu0 %v1857
        %2163 = vmatpush1.bf16.msra.mxu0 %v1856
        %2164 = vmatprep.mubr.bf16.mxu0 %v1258
        %2165 = vmatmul.mubr.bf16.gmra.mrb[0].mxu0 %v1257
        %v2166 = vpop.f32.mrb[0].mxu0
        %v2167 = vadd.f32 %v1401, %v2166
        %v2168 = vpop.f32.mrb[0].mxu0
        %v2169 = vadd.f32 %v1405, %v2168
        %v2170 = vpop.f32.mrb[0].mxu0
        %v2171 = vpop.f32.mrb[0].mxu0
        %2172 = vdwg.mxu0
        %2173 = vmatprep.subr.bf16.mxu0 %v1861
        %2174 = vmatpush1.bf16.msra.mxu0 %v1860
        %2175 = vmatprep.subr.bf16.mxu0 %v1865
        %2176 = vmatpush1.bf16.msra.mxu0 %v1864
        %2177 = vmatprep.subr.bf16.mxu0 %v1869
        %2178 = vmatpush1.bf16.msra.mxu0 %v1868
        %2179 = vmatprep.subr.bf16.mxu0 %v1873
        %2180 = vmatpush1.bf16.msra.mxu0 %v1872
        %2181 = vmatprep.subr.bf16.mxu0 %v1877
        %2182 = vmatpush1.bf16.msra.mxu0 %v1876
        %2183 = vmatprep.subr.bf16.mxu0 %v1881
        %2184 = vmatpush1.bf16.msra.mxu0 %v1880
        %2185 = vmatprep.subr.bf16.mxu0 %v1885
        %2186 = vmatpush1.bf16.msra.mxu0 %v1884
        %2187 = vmatprep.subr.bf16.mxu0 %v1889
        %2188 = vmatpush1.bf16.msra.mxu0 %v1888
        %2189 = vmatprep.subr.bf16.mxu0 %v1893
        %2190 = vmatpush1.bf16.msra.mxu0 %v1892
        %2191 = vmatprep.subr.bf16.mxu0 %v1897
        %2192 = vmatpush1.bf16.msra.mxu0 %v1896
        %2193 = vmatprep.subr.bf16.mxu0 %v1901
        %2194 = vmatpush1.bf16.msra.mxu0 %v1900
        %2195 = vmatprep.subr.bf16.mxu0 %v1905
        %2196 = vmatpush1.bf16.msra.mxu0 %v1904
        %2197 = vmatprep.subr.bf16.mxu0 %v1909
        %2198 = vmatpush1.bf16.msra.mxu0 %v1908
        %2199 = vmatprep.subr.bf16.mxu0 %v1913
        %2200 = vmatpush1.bf16.msra.mxu0 %v1912
        %2201 = vmatprep.subr.bf16.mxu0 %v1917
        %2202 = vmatpush1.bf16.msra.mxu0 %v1916
        %2203 = vmatprep.subr.bf16.mxu0 %v1921
        %2204 = vmatpush1.bf16.msra.mxu0 %v1920
        %2205 = vmatprep.mubr.bf16.mxu0 %v1260
        %2206 = vmatmul.mubr.bf16.gmra.mrb[0].mxu0 %v1259
        %v2207 = vpop.f32.mrb[0].mxu0
        %v2208 = vadd.f32 %v2167, %v2207
        %v2209 = vpop.f32.mrb[0].mxu0
        %v2210 = vadd.f32 %v2169, %v2209
        %v2211 = vpop.f32.mrb[0].mxu0
        %v2212 = vpop.f32.mrb[0].mxu0
        %2213 = vdwg.mxu0
        %v2214 = vmax.f32 %v2126, 0.0
        %v2215 = vmax.f32 %v2128, 0.0
        %v2216 = vmax.f32 %v2208, 0.0
        %v2217 = vmax.f32 %v2210, 0.0
        %v2218 = vpack.c.bf16 %v2214, %v2214
        %v2219 = vpack.c.bf16 %v2215, %v2215
        %v2220 = vpack.c.bf16 %v2216, %v2216
        %v2221 = vpack.c.bf16 %v2217, %v2217
        %v2222 = vld [vmem:[%s3] sm:$0xff]
        %v2223 = vld [vmem:[%s3 + $0x8] sm:$0xff]
        %v2224 = vld [vmem:[%s3 + $0x10] sm:$0xff]
        %v2225 = vld [vmem:[%s3 + $0x18] sm:$0xff]
        %v2226 = vld [vmem:[%s3 + $0x20] sm:$0xff]
        %v2227 = vld [vmem:[%s3 + $0x28] sm:$0xff]
        %v2228 = vld [vmem:[%s3 + $0x30] sm:$0xff]
        %v2229 = vld [vmem:[%s3 + $0x38] sm:$0xff]
        %v2230 = vld [vmem:[%s3 + $0x40] sm:$0xff]
        %v2231 = vld [vmem:[%s3 + $0x48] sm:$0xff]
        %v2232 = vld [vmem:[%s3 + $0x50] sm:$0xff]
        %v2233 = vld [vmem:[%s3 + $0x58] sm:$0xff]
        %v2234 = vld [vmem:[%s3 + $0x60] sm:$0xff]
        %v2235 = vld [vmem:[%s3 + $0x68] sm:$0xff]
        %v2236 = vld [vmem:[%s3 + $0x70] sm:$0xff]
        %v2237 = vld [vmem:[%s3 + $0x78] sm:$0xff]
        %v2238 = vld [vmem:[%s3 + $0x80] sm:$0xff]
        %v2239 = vld [vmem:[%s3 + $0x88] sm:$0xff]
        %v2240 = vld [vmem:[%s3 + $0x90] sm:$0xff]
        %v2241 = vld [vmem:[%s3 + $0x98] sm:$0xff]
        %v2242 = vld [vmem:[%s3 + $0xa0] sm:$0xff]
        %v2243 = vld [vmem:[%s3 + $0xa8] sm:$0xff]
        %v2244 = vld [vmem:[%s3 + $0xb0] sm:$0xff]
        %v2245 = vld [vmem:[%s3 + $0xb8] sm:$0xff]
        %v2246 = vld [vmem:[%s3 + $0xc0] sm:$0xff]
        %v2247 = vld [vmem:[%s3 + $0xc8] sm:$0xff]
        %v2248 = vld [vmem:[%s3 + $0xd0] sm:$0xff]
        %v2249 = vld [vmem:[%s3 + $0xd8] sm:$0xff]
        %v2250 = vld [vmem:[%s3 + $0xe0] sm:$0xff]
        %v2251 = vld [vmem:[%s3 + $0xe8] sm:$0xff]
        %v2252 = vld [vmem:[%s3 + $0xf0] sm:$0xff]
        %v2253 = vld [vmem:[%s3 + $0xf8] sm:$0xff]
        %v2254 = vld [vmem:[%s3 + $0x100] sm:$0xff]
        %v2255 = vld [vmem:[%s3 + $0x108] sm:$0xff]
        %v2256 = vld [vmem:[%s3 + $0x110] sm:$0xff]
        %v2257 = vld [vmem:[%s3 + $0x118] sm:$0xff]
        %v2258 = vld [vmem:[%s3 + $0x120] sm:$0xff]
        %v2259 = vld [vmem:[%s3 + $0x128] sm:$0xff]
        %v2260 = vld [vmem:[%s3 + $0x130] sm:$0xff]
        %v2261 = vld [vmem:[%s3 + $0x138] sm:$0xff]
        %v2262 = vld [vmem:[%s3 + $0x140] sm:$0xff]
        %v2263 = vld [vmem:[%s3 + $0x148] sm:$0xff]
        %v2264 = vld [vmem:[%s3 + $0x150] sm:$0xff]
        %v2265 = vld [vmem:[%s3 + $0x158] sm:$0xff]
        %v2266 = vld [vmem:[%s3 + $0x160] sm:$0xff]
        %v2267 = vld [vmem:[%s3 + $0x168] sm:$0xff]
        %v2268 = vld [vmem:[%s3 + $0x170] sm:$0xff]
        %v2269 = vld [vmem:[%s3 + $0x178] sm:$0xff]
        %v2270 = vld [vmem:[%s3 + $0x180] sm:$0xff]
        %v2271 = vld [vmem:[%s3 + $0x188] sm:$0xff]
        %v2272 = vld [vmem:[%s3 + $0x190] sm:$0xff]
        %v2273 = vld [vmem:[%s3 + $0x198] sm:$0xff]
        %v2274 = vld [vmem:[%s3 + $0x1a0] sm:$0xff]
        %v2275 = vld [vmem:[%s3 + $0x1a8] sm:$0xff]
        %v2276 = vld [vmem:[%s3 + $0x1b0] sm:$0xff]
        %v2277 = vld [vmem:[%s3 + $0x1b8] sm:$0xff]
        %v2278 = vld [vmem:[%s3 + $0x1c0] sm:$0xff]
        %v2279 = vld [vmem:[%s3 + $0x1c8] sm:$0xff]
        %v2280 = vld [vmem:[%s3 + $0x1d0] sm:$0xff]
        %v2281 = vld [vmem:[%s3 + $0x1d8] sm:$0xff]
        %v2282 = vld [vmem:[%s3 + $0x1e0] sm:$0xff]
        %v2283 = vld [vmem:[%s3 + $0x1e8] sm:$0xff]
        %v2284 = vld [vmem:[%s3 + $0x1f0] sm:$0xff]
        %v2285 = vld [vmem:[%s3 + $0x1f8] sm:$0xff]
        %v2286 = vld [vmem:[%s3 + $0x200] sm:$0xff]
        %v2287 = vld [vmem:[%s3 + $0x208] sm:$0xff]
        %v2288 = vld [vmem:[%s3 + $0x210] sm:$0xff]
        %v2289 = vld [vmem:[%s3 + $0x218] sm:$0xff]
        %v2290 = vld [vmem:[%s3 + $0x220] sm:$0xff]
        %v2291 = vld [vmem:[%s3 + $0x228] sm:$0xff]
        %v2292 = vld [vmem:[%s3 + $0x230] sm:$0xff]
        %v2293 = vld [vmem:[%s3 + $0x238] sm:$0xff]
        %v2294 = vld [vmem:[%s3 + $0x240] sm:$0xff]
        %v2295 = vld [vmem:[%s3 + $0x248] sm:$0xff]
        %v2296 = vld [vmem:[%s3 + $0x250] sm:$0xff]
        %v2297 = vld [vmem:[%s3 + $0x258] sm:$0xff]
        %v2298 = vld [vmem:[%s3 + $0x260] sm:$0xff]
        %v2299 = vld [vmem:[%s3 + $0x268] sm:$0xff]
        %v2300 = vld [vmem:[%s3 + $0x270] sm:$0xff]
        %v2301 = vld [vmem:[%s3 + $0x278] sm:$0xff]
        %v2302 = vld [vmem:[%s3 + $0x280] sm:$0xff]
        %v2303 = vld [vmem:[%s3 + $0x288] sm:$0xff]
        %v2304 = vld [vmem:[%s3 + $0x290] sm:$0xff]
        %v2305 = vld [vmem:[%s3 + $0x298] sm:$0xff]
        %v2306 = vld [vmem:[%s3 + $0x2a0] sm:$0xff]
        %v2307 = vld [vmem:[%s3 + $0x2a8] sm:$0xff]
        %v2308 = vld [vmem:[%s3 + $0x2b0] sm:$0xff]
        %v2309 = vld [vmem:[%s3 + $0x2b8] sm:$0xff]
        %v2310 = vld [vmem:[%s3 + $0x2c0] sm:$0xff]
        %v2311 = vld [vmem:[%s3 + $0x2c8] sm:$0xff]
        %v2312 = vld [vmem:[%s3 + $0x2d0] sm:$0xff]
        %v2313 = vld [vmem:[%s3 + $0x2d8] sm:$0xff]
        %v2314 = vld [vmem:[%s3 + $0x2e0] sm:$0xff]
        %v2315 = vld [vmem:[%s3 + $0x2e8] sm:$0xff]
        %v2316 = vld [vmem:[%s3 + $0x2f0] sm:$0xff]
        %v2317 = vld [vmem:[%s3 + $0x2f8] sm:$0xff]
        %v2318 = vld [vmem:[%s3 + $0x300] sm:$0xff]
        %v2319 = vld [vmem:[%s3 + $0x308] sm:$0xff]
        %v2320 = vld [vmem:[%s3 + $0x310] sm:$0xff]
        %v2321 = vld [vmem:[%s3 + $0x318] sm:$0xff]
        %v2322 = vld [vmem:[%s3 + $0x320] sm:$0xff]
        %v2323 = vld [vmem:[%s3 + $0x328] sm:$0xff]
        %v2324 = vld [vmem:[%s3 + $0x330] sm:$0xff]
        %v2325 = vld [vmem:[%s3 + $0x338] sm:$0xff]
        %v2326 = vld [vmem:[%s3 + $0x340] sm:$0xff]
        %v2327 = vld [vmem:[%s3 + $0x348] sm:$0xff]
        %v2328 = vld [vmem:[%s3 + $0x350] sm:$0xff]
        %v2329 = vld [vmem:[%s3 + $0x358] sm:$0xff]
        %v2330 = vld [vmem:[%s3 + $0x360] sm:$0xff]
        %v2331 = vld [vmem:[%s3 + $0x368] sm:$0xff]
        %v2332 = vld [vmem:[%s3 + $0x370] sm:$0xff]
        %v2333 = vld [vmem:[%s3 + $0x378] sm:$0xff]
        %v2334 = vld [vmem:[%s3 + $0x380] sm:$0xff]
        %v2335 = vld [vmem:[%s3 + $0x388] sm:$0xff]
        %v2336 = vld [vmem:[%s3 + $0x390] sm:$0xff]
        %v2337 = vld [vmem:[%s3 + $0x398] sm:$0xff]
        %v2338 = vld [vmem:[%s3 + $0x3a0] sm:$0xff]
        %v2339 = vld [vmem:[%s3 + $0x3a8] sm:$0xff]
        %v2340 = vld [vmem:[%s3 + $0x3b0] sm:$0xff]
        %v2341 = vld [vmem:[%s3 + $0x3b8] sm:$0xff]
        %v2342 = vld [vmem:[%s3 + $0x3c0] sm:$0xff]
        %v2343 = vld [vmem:[%s3 + $0x3c8] sm:$0xff]
        %v2344 = vld [vmem:[%s3 + $0x3d0] sm:$0xff]
        %v2345 = vld [vmem:[%s3 + $0x3d8] sm:$0xff]
        %v2346 = vld [vmem:[%s3 + $0x3e0] sm:$0xff]
        %v2347 = vld [vmem:[%s3 + $0x3e8] sm:$0xff]
        %v2348 = vld [vmem:[%s3 + $0x3f0] sm:$0xff]
        %v2349 = vld [vmem:[%s3 + $0x3f8] sm:$0xff]
        %v2351 = vlaneseq
        %v2352 = vshrl.u32 %v2351, 7
        %v2353 = vsub.s32 0, %v2352
        %v2354 = vrot.slane %v1256, %v2353
        %v2355 = vlaneseq
        %v2356 = vshrl.u32 %v2355, 7
        %v2357 = vsub.s32 1, %v2356
        %v2358 = vrot.slane %v1256, %v2357
        %v2359 = vlaneseq
        %v2360 = vshrl.u32 %v2359, 7
        %v2361 = vsub.s32 2, %v2360
        %v2362 = vrot.slane %v1256, %v2361
        %v2363 = vlaneseq
        %v2364 = vshrl.u32 %v2363, 7
        %v2365 = vsub.s32 3, %v2364
        %v2366 = vrot.slane %v1256, %v2365
        %v2499 = vunpack.c.l.b16 %v2222
        %v2500 = vunpack.c.h.b16 %v2222
        %v2501 = vunpack.c.l.b16 %v2223
        %v2502 = vunpack.c.h.b16 %v2223
        %v2503 = vunpack.c.l.b16 %v2224
        %v2504 = vunpack.c.h.b16 %v2224
        %v2505 = vunpack.c.l.b16 %v2225
        %v2506 = vunpack.c.h.b16 %v2225
        %v2507 = vunpack.c.l.b16 %v2226
        %v2508 = vunpack.c.h.b16 %v2226
        %v2509 = vunpack.c.l.b16 %v2227
        %v2510 = vunpack.c.h.b16 %v2227
        %v2511 = vunpack.c.l.b16 %v2228
        %v2512 = vunpack.c.h.b16 %v2228
        %v2513 = vunpack.c.l.b16 %v2229
        %v2514 = vunpack.c.h.b16 %v2229
        %v2515 = vunpack.c.l.b16 %v2230
        %v2516 = vunpack.c.h.b16 %v2230
        %v2517 = vunpack.c.l.b16 %v2231
        %v2518 = vunpack.c.h.b16 %v2231
        %v2519 = vunpack.c.l.b16 %v2232
        %v2520 = vunpack.c.h.b16 %v2232
        %v2521 = vunpack.c.l.b16 %v2233
        %v2522 = vunpack.c.h.b16 %v2233
        %v2523 = vunpack.c.l.b16 %v2234
        %v2524 = vunpack.c.h.b16 %v2234
        %v2525 = vunpack.c.l.b16 %v2235
        %v2526 = vunpack.c.h.b16 %v2235
        %v2527 = vunpack.c.l.b16 %v2236
        %v2528 = vunpack.c.h.b16 %v2236
        %v2529 = vunpack.c.l.b16 %v2237
        %v2530 = vunpack.c.h.b16 %v2237
        %v2531 = vunpack.c.l.b16 %v2238
        %v2532 = vunpack.c.h.b16 %v2238
        %v2533 = vunpack.c.l.b16 %v2239
        %v2534 = vunpack.c.h.b16 %v2239
        %v2535 = vunpack.c.l.b16 %v2240
        %v2536 = vunpack.c.h.b16 %v2240
        %v2537 = vunpack.c.l.b16 %v2241
        %v2538 = vunpack.c.h.b16 %v2241
        %v2539 = vunpack.c.l.b16 %v2242
        %v2540 = vunpack.c.h.b16 %v2242
        %v2541 = vunpack.c.l.b16 %v2243
        %v2542 = vunpack.c.h.b16 %v2243
        %v2543 = vunpack.c.l.b16 %v2244
        %v2544 = vunpack.c.h.b16 %v2244
        %v2545 = vunpack.c.l.b16 %v2245
        %v2546 = vunpack.c.h.b16 %v2245
        %v2547 = vunpack.c.l.b16 %v2246
        %v2548 = vunpack.c.h.b16 %v2246
        %v2549 = vunpack.c.l.b16 %v2247
        %v2550 = vunpack.c.h.b16 %v2247
        %v2551 = vunpack.c.l.b16 %v2248
        %v2552 = vunpack.c.h.b16 %v2248
        %v2553 = vunpack.c.l.b16 %v2249
        %v2554 = vunpack.c.h.b16 %v2249
        %v2555 = vunpack.c.l.b16 %v2250
        %v2556 = vunpack.c.h.b16 %v2250
        %v2557 = vunpack.c.l.b16 %v2251
        %v2558 = vunpack.c.h.b16 %v2251
        %v2559 = vunpack.c.l.b16 %v2252
        %v2560 = vunpack.c.h.b16 %v2252
        %v2561 = vunpack.c.l.b16 %v2253
        %v2562 = vunpack.c.h.b16 %v2253
        %v2563 = vunpack.c.l.b16 %v2254
        %v2564 = vunpack.c.h.b16 %v2254
        %v2565 = vunpack.c.l.b16 %v2255
        %v2566 = vunpack.c.h.b16 %v2255
        %v2567 = vunpack.c.l.b16 %v2256
        %v2568 = vunpack.c.h.b16 %v2256
        %v2569 = vunpack.c.l.b16 %v2257
        %v2570 = vunpack.c.h.b16 %v2257
        %v2571 = vunpack.c.l.b16 %v2258
        %v2572 = vunpack.c.h.b16 %v2258
        %v2573 = vunpack.c.l.b16 %v2259
        %v2574 = vunpack.c.h.b16 %v2259
        %v2575 = vunpack.c.l.b16 %v2260
        %v2576 = vunpack.c.h.b16 %v2260
        %v2577 = vunpack.c.l.b16 %v2261
        %v2578 = vunpack.c.h.b16 %v2261
        %v2579 = vunpack.c.l.b16 %v2262
        %v2580 = vunpack.c.h.b16 %v2262
        %v2581 = vunpack.c.l.b16 %v2263
        %v2582 = vunpack.c.h.b16 %v2263
        %v2583 = vunpack.c.l.b16 %v2264
        %v2584 = vunpack.c.h.b16 %v2264
        %v2585 = vunpack.c.l.b16 %v2265
        %v2586 = vunpack.c.h.b16 %v2265
        %v2587 = vunpack.c.l.b16 %v2266
        %v2588 = vunpack.c.h.b16 %v2266
        %v2589 = vunpack.c.l.b16 %v2267
        %v2590 = vunpack.c.h.b16 %v2267
        %v2591 = vunpack.c.l.b16 %v2268
        %v2592 = vunpack.c.h.b16 %v2268
        %v2593 = vunpack.c.l.b16 %v2269
        %v2594 = vunpack.c.h.b16 %v2269
        %v2595 = vunpack.c.l.b16 %v2270
        %v2596 = vunpack.c.h.b16 %v2270
        %v2597 = vunpack.c.l.b16 %v2271
        %v2598 = vunpack.c.h.b16 %v2271
        %v2599 = vunpack.c.l.b16 %v2272
        %v2600 = vunpack.c.h.b16 %v2272
        %v2601 = vunpack.c.l.b16 %v2273
        %v2602 = vunpack.c.h.b16 %v2273
        %v2603 = vunpack.c.l.b16 %v2274
        %v2604 = vunpack.c.h.b16 %v2274
        %v2605 = vunpack.c.l.b16 %v2275
        %v2606 = vunpack.c.h.b16 %v2275
        %v2607 = vunpack.c.l.b16 %v2276
        %v2608 = vunpack.c.h.b16 %v2276
        %v2609 = vunpack.c.l.b16 %v2277
        %v2610 = vunpack.c.h.b16 %v2277
        %v2611 = vunpack.c.l.b16 %v2278
        %v2612 = vunpack.c.h.b16 %v2278
        %v2613 = vunpack.c.l.b16 %v2279
        %v2614 = vunpack.c.h.b16 %v2279
        %v2615 = vunpack.c.l.b16 %v2280
        %v2616 = vunpack.c.h.b16 %v2280
        %v2617 = vunpack.c.l.b16 %v2281
        %v2618 = vunpack.c.h.b16 %v2281
        %v2619 = vunpack.c.l.b16 %v2282
        %v2620 = vunpack.c.h.b16 %v2282
        %v2621 = vunpack.c.l.b16 %v2283
        %v2622 = vunpack.c.h.b16 %v2283
        %v2623 = vunpack.c.l.b16 %v2284
        %v2624 = vunpack.c.h.b16 %v2284
        %v2625 = vunpack.c.l.b16 %v2285
        %v2626 = vunpack.c.h.b16 %v2285
        %v2627 = vunpack.c.l.b16 %v2286
        %v2628 = vunpack.c.h.b16 %v2286
        %v2629 = vunpack.c.l.b16 %v2287
        %v2630 = vunpack.c.h.b16 %v2287
        %v2631 = vunpack.c.l.b16 %v2288
        %v2632 = vunpack.c.h.b16 %v2288
        %v2633 = vunpack.c.l.b16 %v2289
        %v2634 = vunpack.c.h.b16 %v2289
        %v2635 = vunpack.c.l.b16 %v2290
        %v2636 = vunpack.c.h.b16 %v2290
        %v2637 = vunpack.c.l.b16 %v2291
        %v2638 = vunpack.c.h.b16 %v2291
        %v2639 = vunpack.c.l.b16 %v2292
        %v2640 = vunpack.c.h.b16 %v2292
        %v2641 = vunpack.c.l.b16 %v2293
        %v2642 = vunpack.c.h.b16 %v2293
        %v2643 = vunpack.c.l.b16 %v2294
        %v2644 = vunpack.c.h.b16 %v2294
        %v2645 = vunpack.c.l.b16 %v2295
        %v2646 = vunpack.c.h.b16 %v2295
        %v2647 = vunpack.c.l.b16 %v2296
        %v2648 = vunpack.c.h.b16 %v2296
        %v2649 = vunpack.c.l.b16 %v2297
        %v2650 = vunpack.c.h.b16 %v2297
        %v2651 = vunpack.c.l.b16 %v2298
        %v2652 = vunpack.c.h.b16 %v2298
        %v2653 = vunpack.c.l.b16 %v2299
        %v2654 = vunpack.c.h.b16 %v2299
        %v2655 = vunpack.c.l.b16 %v2300
        %v2656 = vunpack.c.h.b16 %v2300
        %v2657 = vunpack.c.l.b16 %v2301
        %v2658 = vunpack.c.h.b16 %v2301
        %v2659 = vunpack.c.l.b16 %v2302
        %v2660 = vunpack.c.h.b16 %v2302
        %v2661 = vunpack.c.l.b16 %v2303
        %v2662 = vunpack.c.h.b16 %v2303
        %v2663 = vunpack.c.l.b16 %v2304
        %v2664 = vunpack.c.h.b16 %v2304
        %v2665 = vunpack.c.l.b16 %v2305
        %v2666 = vunpack.c.h.b16 %v2305
        %v2667 = vunpack.c.l.b16 %v2306
        %v2668 = vunpack.c.h.b16 %v2306
        %v2669 = vunpack.c.l.b16 %v2307
        %v2670 = vunpack.c.h.b16 %v2307
        %v2671 = vunpack.c.l.b16 %v2308
        %v2672 = vunpack.c.h.b16 %v2308
        %v2673 = vunpack.c.l.b16 %v2309
        %v2674 = vunpack.c.h.b16 %v2309
        %v2675 = vunpack.c.l.b16 %v2310
        %v2676 = vunpack.c.h.b16 %v2310
        %v2677 = vunpack.c.l.b16 %v2311
        %v2678 = vunpack.c.h.b16 %v2311
        %v2679 = vunpack.c.l.b16 %v2312
        %v2680 = vunpack.c.h.b16 %v2312
        %v2681 = vunpack.c.l.b16 %v2313
        %v2682 = vunpack.c.h.b16 %v2313
        %v2683 = vunpack.c.l.b16 %v2314
        %v2684 = vunpack.c.h.b16 %v2314
        %v2685 = vunpack.c.l.b16 %v2315
        %v2686 = vunpack.c.h.b16 %v2315
        %v2687 = vunpack.c.l.b16 %v2316
        %v2688 = vunpack.c.h.b16 %v2316
        %v2689 = vunpack.c.l.b16 %v2317
        %v2690 = vunpack.c.h.b16 %v2317
        %v2691 = vunpack.c.l.b16 %v2318
        %v2692 = vunpack.c.h.b16 %v2318
        %v2693 = vunpack.c.l.b16 %v2319
        %v2694 = vunpack.c.h.b16 %v2319
        %v2695 = vunpack.c.l.b16 %v2320
        %v2696 = vunpack.c.h.b16 %v2320
        %v2697 = vunpack.c.l.b16 %v2321
        %v2698 = vunpack.c.h.b16 %v2321
        %v2699 = vunpack.c.l.b16 %v2322
        %v2700 = vunpack.c.h.b16 %v2322
        %v2701 = vunpack.c.l.b16 %v2323
        %v2702 = vunpack.c.h.b16 %v2323
        %v2703 = vunpack.c.l.b16 %v2324
        %v2704 = vunpack.c.h.b16 %v2324
        %v2705 = vunpack.c.l.b16 %v2325
        %v2706 = vunpack.c.h.b16 %v2325
        %v2707 = vunpack.c.l.b16 %v2326
        %v2708 = vunpack.c.h.b16 %v2326
        %v2709 = vunpack.c.l.b16 %v2327
        %v2710 = vunpack.c.h.b16 %v2327
        %v2711 = vunpack.c.l.b16 %v2328
        %v2712 = vunpack.c.h.b16 %v2328
        %v2713 = vunpack.c.l.b16 %v2329
        %v2714 = vunpack.c.h.b16 %v2329
        %v2715 = vunpack.c.l.b16 %v2330
        %v2716 = vunpack.c.h.b16 %v2330
        %v2717 = vunpack.c.l.b16 %v2331
        %v2718 = vunpack.c.h.b16 %v2331
        %v2719 = vunpack.c.l.b16 %v2332
        %v2720 = vunpack.c.h.b16 %v2332
        %v2721 = vunpack.c.l.b16 %v2333
        %v2722 = vunpack.c.h.b16 %v2333
        %v2723 = vunpack.c.l.b16 %v2334
        %v2724 = vunpack.c.h.b16 %v2334
        %v2725 = vunpack.c.l.b16 %v2335
        %v2726 = vunpack.c.h.b16 %v2335
        %v2727 = vunpack.c.l.b16 %v2336
        %v2728 = vunpack.c.h.b16 %v2336
        %v2729 = vunpack.c.l.b16 %v2337
        %v2730 = vunpack.c.h.b16 %v2337
        %v2731 = vunpack.c.l.b16 %v2338
        %v2732 = vunpack.c.h.b16 %v2338
        %v2733 = vunpack.c.l.b16 %v2339
        %v2734 = vunpack.c.h.b16 %v2339
        %v2735 = vunpack.c.l.b16 %v2340
        %v2736 = vunpack.c.h.b16 %v2340
        %v2737 = vunpack.c.l.b16 %v2341
        %v2738 = vunpack.c.h.b16 %v2341
        %v2739 = vunpack.c.l.b16 %v2342
        %v2740 = vunpack.c.h.b16 %v2342
        %v2741 = vunpack.c.l.b16 %v2343
        %v2742 = vunpack.c.h.b16 %v2343
        %v2743 = vunpack.c.l.b16 %v2344
        %v2744 = vunpack.c.h.b16 %v2344
        %v2745 = vunpack.c.l.b16 %v2345
        %v2746 = vunpack.c.h.b16 %v2345
        %v2747 = vunpack.c.l.b16 %v2346
        %v2748 = vunpack.c.h.b16 %v2346
        %v2749 = vunpack.c.l.b16 %v2347
        %v2750 = vunpack.c.h.b16 %v2347
        %v2751 = vunpack.c.l.b16 %v2348
        %v2752 = vunpack.c.h.b16 %v2348
        %v2753 = vunpack.c.l.b16 %v2349
        %v2754 = vunpack.c.h.b16 %v2349
        %v2755 = vpack.c.b16 %v2503, %v2499
        %v2756 = vpack.c.b16 %v2504, %v2500
        %v2757 = vpack.c.b16 %v2505, %v2501
        %v2758 = vpack.c.b16 %v2506, %v2502
        %v2759 = vpack.c.b16 %v2511, %v2507
        %v2760 = vpack.c.b16 %v2512, %v2508
        %v2761 = vpack.c.b16 %v2513, %v2509
        %v2762 = vpack.c.b16 %v2514, %v2510
        %v2763 = vpack.c.b16 %v2519, %v2515
        %v2764 = vpack.c.b16 %v2520, %v2516
        %v2765 = vpack.c.b16 %v2521, %v2517
        %v2766 = vpack.c.b16 %v2522, %v2518
        %v2767 = vpack.c.b16 %v2527, %v2523
        %v2768 = vpack.c.b16 %v2528, %v2524
        %v2769 = vpack.c.b16 %v2529, %v2525
        %v2770 = vpack.c.b16 %v2530, %v2526
        %v2771 = vpack.c.b16 %v2535, %v2531
        %v2772 = vpack.c.b16 %v2536, %v2532
        %v2773 = vpack.c.b16 %v2537, %v2533
        %v2774 = vpack.c.b16 %v2538, %v2534
        %v2775 = vpack.c.b16 %v2543, %v2539
        %v2776 = vpack.c.b16 %v2544, %v2540
        %v2777 = vpack.c.b16 %v2545, %v2541
        %v2778 = vpack.c.b16 %v2546, %v2542
        %v2779 = vpack.c.b16 %v2551, %v2547
        %v2780 = vpack.c.b16 %v2552, %v2548
        %v2781 = vpack.c.b16 %v2553, %v2549
        %v2782 = vpack.c.b16 %v2554, %v2550
        %v2783 = vpack.c.b16 %v2559, %v2555
        %v2784 = vpack.c.b16 %v2560, %v2556
        %v2785 = vpack.c.b16 %v2561, %v2557
        %v2786 = vpack.c.b16 %v2562, %v2558
        %v2787 = vpack.c.b16 %v2567, %v2563
        %v2788 = vpack.c.b16 %v2568, %v2564
        %v2789 = vpack.c.b16 %v2569, %v2565
        %v2790 = vpack.c.b16 %v2570, %v2566
        %v2791 = vpack.c.b16 %v2575, %v2571
        %v2792 = vpack.c.b16 %v2576, %v2572
        %v2793 = vpack.c.b16 %v2577, %v2573
        %v2794 = vpack.c.b16 %v2578, %v2574
        %v2795 = vpack.c.b16 %v2583, %v2579
        %v2796 = vpack.c.b16 %v2584, %v2580
        %v2797 = vpack.c.b16 %v2585, %v2581
        %v2798 = vpack.c.b16 %v2586, %v2582
        %v2799 = vpack.c.b16 %v2591, %v2587
        %v2800 = vpack.c.b16 %v2592, %v2588
        %v2801 = vpack.c.b16 %v2593, %v2589
        %v2802 = vpack.c.b16 %v2594, %v2590
        %v2803 = vpack.c.b16 %v2599, %v2595
        %v2804 = vpack.c.b16 %v2600, %v2596
        %v2805 = vpack.c.b16 %v2601, %v2597
        %v2806 = vpack.c.b16 %v2602, %v2598
        %v2807 = vpack.c.b16 %v2607, %v2603
        %v2808 = vpack.c.b16 %v2608, %v2604
        %v2809 = vpack.c.b16 %v2609, %v2605
        %v2810 = vpack.c.b16 %v2610, %v2606
        %v2811 = vpack.c.b16 %v2615, %v2611
        %v2812 = vpack.c.b16 %v2616, %v2612
        %v2813 = vpack.c.b16 %v2617, %v2613
        %v2814 = vpack.c.b16 %v2618, %v2614
        %v2815 = vpack.c.b16 %v2623, %v2619
        %v2816 = vpack.c.b16 %v2624, %v2620
        %v2817 = vpack.c.b16 %v2625, %v2621
        %v2818 = vpack.c.b16 %v2626, %v2622
        %v2819 = vpack.c.b16 %v2631, %v2627
        %v2820 = vpack.c.b16 %v2632, %v2628
        %v2821 = vpack.c.b16 %v2633, %v2629
        %v2822 = vpack.c.b16 %v2634, %v2630
        %v2823 = vpack.c.b16 %v2639, %v2635
        %v2824 = vpack.c.b16 %v2640, %v2636
        %v2825 = vpack.c.b16 %v2641, %v2637
        %v2826 = vpack.c.b16 %v2642, %v2638
        %v2827 = vpack.c.b16 %v2647, %v2643
        %v2828 = vpack.c.b16 %v2648, %v2644
        %v2829 = vpack.c.b16 %v2649, %v2645
        %v2830 = vpack.c.b16 %v2650, %v2646
        %v2831 = vpack.c.b16 %v2655, %v2651
        %v2832 = vpack.c.b16 %v2656, %v2652
        %v2833 = vpack.c.b16 %v2657, %v2653
        %v2834 = vpack.c.b16 %v2658, %v2654
        %v2835 = vpack.c.b16 %v2663, %v2659
        %v2836 = vpack.c.b16 %v2664, %v2660
        %v2837 = vpack.c.b16 %v2665, %v2661
        %v2838 = vpack.c.b16 %v2666, %v2662
        %v2839 = vpack.c.b16 %v2671, %v2667
        %v2840 = vpack.c.b16 %v2672, %v2668
        %v2841 = vpack.c.b16 %v2673, %v2669
        %v2842 = vpack.c.b16 %v2674, %v2670
        %v2843 = vpack.c.b16 %v2679, %v2675
        %v2844 = vpack.c.b16 %v2680, %v2676
        %v2845 = vpack.c.b16 %v2681, %v2677
        %v2846 = vpack.c.b16 %v2682, %v2678
        %v2847 = vpack.c.b16 %v2687, %v2683
        %v2848 = vpack.c.b16 %v2688, %v2684
        %v2849 = vpack.c.b16 %v2689, %v2685
        %v2850 = vpack.c.b16 %v2690, %v2686
        %v2851 = vpack.c.b16 %v2695, %v2691
        %v2852 = vpack.c.b16 %v2696, %v2692
        %v2853 = vpack.c.b16 %v2697, %v2693
        %v2854 = vpack.c.b16 %v2698, %v2694
        %v2855 = vpack.c.b16 %v2703, %v2699
        %v2856 = vpack.c.b16 %v2704, %v2700
        %v2857 = vpack.c.b16 %v2705, %v2701
        %v2858 = vpack.c.b16 %v2706, %v2702
        %v2859 = vpack.c.b16 %v2711, %v2707
        %v2860 = vpack.c.b16 %v2712, %v2708
        %v2861 = vpack.c.b16 %v2713, %v2709
        %v2862 = vpack.c.b16 %v2714, %v2710
        %v2863 = vpack.c.b16 %v2719, %v2715
        %v2864 = vpack.c.b16 %v2720, %v2716
        %v2865 = vpack.c.b16 %v2721, %v2717
        %v2866 = vpack.c.b16 %v2722, %v2718
        %v2867 = vpack.c.b16 %v2727, %v2723
        %v2868 = vpack.c.b16 %v2728, %v2724
        %v2869 = vpack.c.b16 %v2729, %v2725
        %v2870 = vpack.c.b16 %v2730, %v2726
        %v2871 = vpack.c.b16 %v2735, %v2731
        %v2872 = vpack.c.b16 %v2736, %v2732
        %v2873 = vpack.c.b16 %v2737, %v2733
        %v2874 = vpack.c.b16 %v2738, %v2734
        %v2875 = vpack.c.b16 %v2743, %v2739
        %v2876 = vpack.c.b16 %v2744, %v2740
        %v2877 = vpack.c.b16 %v2745, %v2741
        %v2878 = vpack.c.b16 %v2746, %v2742
        %v2879 = vpack.c.b16 %v2751, %v2747
        %v2880 = vpack.c.b16 %v2752, %v2748
        %v2881 = vpack.c.b16 %v2753, %v2749
        %v2882 = vpack.c.b16 %v2754, %v2750
        %3011 = vmatprep.subr.bf16.mxu0 %v2756
        %3012 = vmatpush1.bf16.msra.mxu0 %v2755
        %3013 = vmatprep.subr.bf16.mxu0 %v2760
        %3014 = vmatpush1.bf16.msra.mxu0 %v2759
        %3015 = vmatprep.subr.bf16.mxu0 %v2764
        %3016 = vmatpush1.bf16.msra.mxu0 %v2763
        %3017 = vmatprep.subr.bf16.mxu0 %v2768
        %3018 = vmatpush1.bf16.msra.mxu0 %v2767
        %3019 = vmatprep.subr.bf16.mxu0 %v2772
        %3020 = vmatpush1.bf16.msra.mxu0 %v2771
        %3021 = vmatprep.subr.bf16.mxu0 %v2776
        %3022 = vmatpush1.bf16.msra.mxu0 %v2775
        %3023 = vmatprep.subr.bf16.mxu0 %v2780
        %3024 = vmatpush1.bf16.msra.mxu0 %v2779
        %3025 = vmatprep.subr.bf16.mxu0 %v2784
        %3026 = vmatpush1.bf16.msra.mxu0 %v2783
        %3027 = vmatprep.subr.bf16.mxu0 %v2788
        %3028 = vmatpush1.bf16.msra.mxu0 %v2787
        %3029 = vmatprep.subr.bf16.mxu0 %v2792
        %3030 = vmatpush1.bf16.msra.mxu0 %v2791
        %3031 = vmatprep.subr.bf16.mxu0 %v2796
        %3032 = vmatpush1.bf16.msra.mxu0 %v2795
        %3033 = vmatprep.subr.bf16.mxu0 %v2800
        %3034 = vmatpush1.bf16.msra.mxu0 %v2799
        %3035 = vmatprep.subr.bf16.mxu0 %v2804
        %3036 = vmatpush1.bf16.msra.mxu0 %v2803
        %3037 = vmatprep.subr.bf16.mxu0 %v2808
        %3038 = vmatpush1.bf16.msra.mxu0 %v2807
        %3039 = vmatprep.subr.bf16.mxu0 %v2812
        %3040 = vmatpush1.bf16.msra.mxu0 %v2811
        %3041 = vmatprep.subr.bf16.mxu0 %v2816
        %3042 = vmatpush1.bf16.msra.mxu0 %v2815
        %3043 = vmatprep.mubr.bf16.mxu0 %v2219
        %3044 = vmatmul.mubr.bf16.gmra.mrb[0].mxu0 %v2218
        %v3045 = vpop.f32.mrb[0].mxu0
        %v3046 = vadd.f32 %v2354, %v3045
        %v3047 = vpop.f32.mrb[0].mxu0
        %v3048 = vadd.f32 %v2358, %v3047
        %v3049 = vpop.f32.mrb[0].mxu0
        %v3050 = vpop.f32.mrb[0].mxu0
        %3051 = vdwg.mxu0
        %3052 = vmatprep.subr.bf16.mxu0 %v2820
        %3053 = vmatpush1.bf16.msra.mxu0 %v2819
        %3054 = vmatprep.subr.bf16.mxu0 %v2824
        %3055 = vmatpush1.bf16.msra.mxu0 %v2823
        %3056 = vmatprep.subr.bf16.mxu0 %v2828
        %3057 = vmatpush1.bf16.msra.mxu0 %v2827
        %3058 = vmatprep.subr.bf16.mxu0 %v2832
        %3059 = vmatpush1.bf16.msra.mxu0 %v2831
        %3060 = vmatprep.subr.bf16.mxu0 %v2836
        %3061 = vmatpush1.bf16.msra.mxu0 %v2835
        %3062 = vmatprep.subr.bf16.mxu0 %v2840
        %3063 = vmatpush1.bf16.msra.mxu0 %v2839
        %3064 = vmatprep.subr.bf16.mxu0 %v2844
        %3065 = vmatpush1.bf16.msra.mxu0 %v2843
        %3066 = vmatprep.subr.bf16.mxu0 %v2848
        %3067 = vmatpush1.bf16.msra.mxu0 %v2847
        %3068 = vmatprep.subr.bf16.mxu0 %v2852
        %3069 = vmatpush1.bf16.msra.mxu0 %v2851
        %3070 = vmatprep.subr.bf16.mxu0 %v2856
        %3071 = vmatpush1.bf16.msra.mxu0 %v2855
        %3072 = vmatprep.subr.bf16.mxu0 %v2860
        %3073 = vmatpush1.bf16.msra.mxu0 %v2859
        %3074 = vmatprep.subr.bf16.mxu0 %v2864
        %3075 = vmatpush1.bf16.msra.mxu0 %v2863
        %3076 = vmatprep.subr.bf16.mxu0 %v2868
        %3077 = vmatpush1.bf16.msra.mxu0 %v2867
        %3078 = vmatprep.subr.bf16.mxu0 %v2872
        %3079 = vmatpush1.bf16.msra.mxu0 %v2871
        %3080 = vmatprep.subr.bf16.mxu0 %v2876
        %3081 = vmatpush1.bf16.msra.mxu0 %v2875
        %3082 = vmatprep.subr.bf16.mxu0 %v2880
        %3083 = vmatpush1.bf16.msra.mxu0 %v2879
        %3084 = vmatprep.mubr.bf16.mxu0 %v2221
        %3085 = vmatmul.mubr.bf16.gmra.mrb[0].mxu0 %v2220
        %v3086 = vpop.f32.mrb[0].mxu0
        %v3087 = vadd.f32 %v3046, %v3086
        %v3088 = vpop.f32.mrb[0].mxu0
        %v3089 = vadd.f32 %v3048, %v3088
        %v3090 = vpop.f32.mrb[0].mxu0
        %v3091 = vpop.f32.mrb[0].mxu0
        %3092 = vdwg.mxu0
        %3093 = vmatprep.subr.bf16.mxu0 %v2758
        %3094 = vmatpush1.bf16.msra.mxu0 %v2757
        %3095 = vmatprep.subr.bf16.mxu0 %v2762
        %3096 = vmatpush1.bf16.msra.mxu0 %v2761
        %3097 = vmatprep.subr.bf16.mxu0 %v2766
        %3098 = vmatpush1.bf16.msra.mxu0 %v2765
        %3099 = vmatprep.subr.bf16.mxu0 %v2770
        %3100 = vmatpush1.bf16.msra.mxu0 %v2769
        %3101 = vmatprep.subr.bf16.mxu0 %v2774
        %3102 = vmatpush1.bf16.msra.mxu0 %v2773
        %3103 = vmatprep.subr.bf16.mxu0 %v2778
        %3104 = vmatpush1.bf16.msra.mxu0 %v2777
        %3105 = vmatprep.subr.bf16.mxu0 %v2782
        %3106 = vmatpush1.bf16.msra.mxu0 %v2781
        %3107 = vmatprep.subr.bf16.mxu0 %v2786
        %3108 = vmatpush1.bf16.msra.mxu0 %v2785
        %3109 = vmatprep.subr.bf16.mxu0 %v2790
        %3110 = vmatpush1.bf16.msra.mxu0 %v2789
        %3111 = vmatprep.subr.bf16.mxu0 %v2794
        %3112 = vmatpush1.bf16.msra.mxu0 %v2793
        %3113 = vmatprep.subr.bf16.mxu0 %v2798
        %3114 = vmatpush1.bf16.msra.mxu0 %v2797
        %3115 = vmatprep.subr.bf16.mxu0 %v2802
        %3116 = vmatpush1.bf16.msra.mxu0 %v2801
        %3117 = vmatprep.subr.bf16.mxu0 %v2806
        %3118 = vmatpush1.bf16.msra.mxu0 %v2805
        %3119 = vmatprep.subr.bf16.mxu0 %v2810
        %3120 = vmatpush1.bf16.msra.mxu0 %v2809
        %3121 = vmatprep.subr.bf16.mxu0 %v2814
        %3122 = vmatpush1.bf16.msra.mxu0 %v2813
        %3123 = vmatprep.subr.bf16.mxu0 %v2818
        %3124 = vmatpush1.bf16.msra.mxu0 %v2817
        %3125 = vmatprep.mubr.bf16.mxu0 %v2219
        %3126 = vmatmul.mubr.bf16.gmra.mrb[0].mxu0 %v2218
        %v3127 = vpop.f32.mrb[0].mxu0
        %v3128 = vadd.f32 %v2362, %v3127
        %v3129 = vpop.f32.mrb[0].mxu0
        %v3130 = vadd.f32 %v2366, %v3129
        %v3131 = vpop.f32.mrb[0].mxu0
        %v3132 = vpop.f32.mrb[0].mxu0
        %3133 = vdwg.mxu0
        %3134 = vmatprep.subr.bf16.mxu0 %v2822
        %3135 = vmatpush1.bf16.msra.mxu0 %v2821
        %3136 = vmatprep.subr.bf16.mxu0 %v2826
        %3137 = vmatpush1.bf16.msra.mxu0 %v2825
        %3138 = vmatprep.subr.bf16.mxu0 %v2830
        %3139 = vmatpush1.bf16.msra.mxu0 %v2829
        %3140 = vmatprep.subr.bf16.mxu0 %v2834
        %3141 = vmatpush1.bf16.msra.mxu0 %v2833
        %3142 = vmatprep.subr.bf16.mxu0 %v2838
        %3143 = vmatpush1.bf16.msra.mxu0 %v2837
        %3144 = vmatprep.subr.bf16.mxu0 %v2842
        %3145 = vmatpush1.bf16.msra.mxu0 %v2841
        %3146 = vmatprep.subr.bf16.mxu0 %v2846
        %3147 = vmatpush1.bf16.msra.mxu0 %v2845
        %3148 = vmatprep.subr.bf16.mxu0 %v2850
        %3149 = vmatpush1.bf16.msra.mxu0 %v2849
        %3150 = vmatprep.subr.bf16.mxu0 %v2854
        %3151 = vmatpush1.bf16.msra.mxu0 %v2853
        %3152 = vmatprep.subr.bf16.mxu0 %v2858
        %3153 = vmatpush1.bf16.msra.mxu0 %v2857
        %3154 = vmatprep.subr.bf16.mxu0 %v2862
        %3155 = vmatpush1.bf16.msra.mxu0 %v2861
        %3156 = vmatprep.subr.bf16.mxu0 %v2866
        %3157 = vmatpush1.bf16.msra.mxu0 %v2865
        %3158 = vmatprep.subr.bf16.mxu0 %v2870
        %3159 = vmatpush1.bf16.msra.mxu0 %v2869
        %3160 = vmatprep.subr.bf16.mxu0 %v2874
        %3161 = vmatpush1.bf16.msra.mxu0 %v2873
        %3162 = vmatprep.subr.bf16.mxu0 %v2878
        %3163 = vmatpush1.bf16.msra.mxu0 %v2877
        %3164 = vmatprep.subr.bf16.mxu0 %v2882
        %3165 = vmatpush1.bf16.msra.mxu0 %v2881
        %3166 = vmatprep.mubr.bf16.mxu0 %v2221
        %3167 = vmatmul.mubr.bf16.gmra.mrb[0].mxu0 %v2220
        %v3168 = vpop.f32.mrb[0].mxu0
        %v3169 = vadd.f32 %v3128, %v3168
        %v3170 = vpop.f32.mrb[0].mxu0
        %v3171 = vadd.f32 %v3130, %v3170
        %v3172 = vpop.f32.mrb[0].mxu0
        %v3173 = vpop.f32.mrb[0].mxu0
        %3174 = vdwg.mxu0
        %v3175 = vmul.f32 %v3087, %v3087
        %v3176 = vmul.f32 %v3089, %v3089
        %v3177 = vmul.f32 %v3169, %v3169
        %v3178 = vmul.f32 %v3171, %v3171
        %v3179 = vadd.f32 %v3175, %v3176
        %v3180 = vadd.f32 %v3179, %v3177
        %v3181 = vadd.f32 %v3180, %v3178
        %3182 = vadd.xlane.f32.xlu0 %v3181
        %v3183 = vpop.xlane.xlu0 %3182
        %v3184 = vadd.f32 %v3183, 1e-12
        %v3185 = vrsqrt.pop %v3184
        %v3186 = vmul.f32 %v3087, %v3185
        %v3187 = vmul.f32 %v3089, %v3185
        %v3188 = vmul.f32 %v3169, %v3185
        %v3189 = vmul.f32 %v3171, %v3185
        %3190 = vst [vmem:[%s277] sm:$0xff] %v3186
        %3191 = vst [vmem:[%s277 + $0x8] sm:$0xff] %v3187
        %3192 = vst [vmem:[%s277 + $0x10] sm:$0xff] %v3188
        %3193 = vst [vmem:[%s277 + $0x18] sm:$0xff] %v3189
      $region48: #{custom_clip_forward.1} parent=39 // pred_fallthru
        _
      %p3194 = scmp.lt.s32.totalorder %s20, 0
      %s3195 = scalar_select %p3194, %s20, 0
      %s3196 = smul.addr %s3195, 4
      %s3197 = smul.addr %s3196, 8
      %s3198 = scalar_lea.vmem %s5, %s3197
      // Predicated region
      $region49: #{custom_clip_forward.1} parent=39 // pred_check
        %p3199 = pneg %p163
      $region50: #{custom_clip_forward.1} parent=39 // pred_check_branch
        %3201 = sbr.rel (%p3199) target = $region52
      $region51: #{custom_clip_forward.1} parent=39 // pred_region
        _
      $region52: #{custom_clip_forward.1} parent=39 // pred_fallthru
        _
      // Predicated region
      $region53: #{custom_clip_forward.1} parent=39 // pred_check
        %p3202 = pneg %p163
      $region54: #{custom_clip_forward.1} parent=39 // pred_check_branch
        %3204 = sbr.rel (%p3202) target = $region56
      $region55: #{custom_clip_forward.1} parent=39 // pred_region
        %p3205 = scmp.lt.s32.totalorder %s20, 0
        %s3206 = scalar_select %p3205, %s20, 0
        %s3207 = smul.addr %s3206, 4
        %s3208 = smul.addr %s3207, 8
        %s3209 = scalar_lea.vmem %s5, %s3208
      $region56: #{custom_clip_forward.1} parent=39 // pred_fallthru
        _
    $region40: #{custom_clip_forward.1} parent=5 // pred_fallthru
      _
    %p3210 = scmp.le.s32.totalorder 2, %s11
    // Predicated region
    $region57: #{custom_clip_forward.1} parent=5 // pred_check
      %p3211 = pneg %p3210
    $region58: #{custom_clip_forward.1} parent=5 // pred_check_branch
      %3213 = sbr.rel (%p3211) target = $region60
    $region59: #{custom_clip_forward.1} parent=5 // pred_region
      %s3214 = ssub.s32 %s11, 2
    $region60: #{custom_clip_forward.1} parent=5 // pred_fallthru
      _
  $region6: #{custom_clip_forward.1} parent=0 // loop_footer
    %s15 = sadd.s32 1, %s11
  $region7: #{custom_clip_forward.1} parent=0 // loop_footer_branch
    %10 = sbr.rel target = $region3
  $region8: #{custom_clip_forward.1} parent=0 // loop_exit
    _

</llo_original>
